<compile_context>
chip_gen: v7x
topology: tpu7x:2x2x1
jax: 0.10.0
libtpu: 0.0.40
codegen_flags: <defaults>
</compile_context>

<pallas_src>
import functools

import jax
import jax.numpy as jnp
from jax.experimental import pallas as pl
from jax.experimental.pallas import tpu as pltpu

_LANE = 128
_HAS_BUFFERED = hasattr(pl, "Buffered")
_SINGLE_BUFFER_OK = None  # tri-state: None = untested, True/False = known


def _round_up(n, m):
    return ((n + m - 1) // m) * m


@functools.lru_cache(maxsize=1)
def _vmem_capacity_bytes():
    """Generation-aware VMEM capacity (128 MiB on v5e/v6e, 64 MiB per TC on v7x)."""
    try:
        cap = getattr(pltpu.get_tpu_info(), "vmem_capacity_bytes", None)
        if cap:
            return int(cap)
    except Exception:
        pass
    return 64 << 20  # conservative fallback (v7x per-TC VMEM)


# ---------------------------------------------------------------------------
# Kernel: whole forward (4 matmuls + nonlinearities) on one batch tile.
# ---------------------------------------------------------------------------
def vanilla_ae_kernel(
    x_ref,
    w1_ref, b1_ref,
    w2_ref, b2_ref,
    w3_ref, b3_ref,
    w4_ref, b4_ref,
    out_ref,
):
    cdt = w1_ref.dtype
    # In-kernel cast (f32 -> compute dtype): VPU work hidden under the first matmul.
    x = x_ref[...].astype(cdt)

    # Encoder: Linear -> LeakyReLU(0.2) -> Linear -> Tanh   (f32 accumulate, f32 epilogue)
    h1 = jnp.dot(x, w1_ref[...], preferred_element_type=jnp.float32) + b1_ref[...]
    h1 = jnp.maximum(h1, 0.2 * h1).astype(cdt)            # LeakyReLU: max+mul (1 fewer VALU op)
    z = jnp.dot(h1, w2_ref[...], preferred_element_type=jnp.float32) + b2_ref[...]
    z = jnp.tanh(z).astype(cdt)

    # Decoder: Linear -> LeakyReLU(0.2) -> Linear -> Tanh
    h2 = jnp.dot(z, w3_ref[...], preferred_element_type=jnp.float32) + b3_ref[...]
    h2 = jnp.maximum(h2, 0.2 * h2).astype(cdt)
    y = jnp.dot(h2, w4_ref[...], preferred_element_type=jnp.float32) + b4_ref[...]
    out_ref[...] = jnp.tanh(y).astype(out_ref.dtype)


# ---------------------------------------------------------------------------
# Jitted pallas_call wrapper (pad / slice fused into the same XLA program).
# ---------------------------------------------------------------------------
@functools.partial(jax.jit, static_argnames=("block_b", "single_buffer_weights"))
def _vanilla_ae_pallas(x, w1, b1, w2, b2, w3, b3, w4, b4, *,
                       block_b, single_buffer_weights):
    B, native_dim = x.shape
    Np, Hp = w1.shape
    Lp = w2.shape[1]
    itemsize = w1.dtype.itemsize

    # Lane-pad x's feature dim with zeros only when needed (padded weight rows are 0).
    x_p = x if native_dim == Np else jnp.pad(x, ((0, 0), (0, Np - native_dim)))

    grid = (pl.cdiv(B, block_b),)

    def resident_spec(arr):
        # Constant index_map -> the block never changes across grid steps.
        if single_buffer_weights:
            return pl.BlockSpec(arr.shape, lambda i: (0, 0), pipeline_mode=pl.Buffered(1))
        return pl.BlockSpec(arr.shape, lambda i: (0, 0))

    # ---- VMEM accounting: resident weights + per-step IO + live intermediates ----
    wb_count = 1 if single_buffer_weights else 2
    w_elems = Np * Hp + Hp * Lp + Lp * Hp + Hp * Np
    bias_bytes = (2 * Hp + Lp + Np) * 4
    resident_bytes = wb_count * (w_elems * itemsize + bias_bytes)
    per_row_io = 2 * Np * 4 * 2                                  # x-in + out, f32, double-buffered
    per_row_act = Np * itemsize + (2 * Hp + Lp) * (4 + itemsize) + Np * 4
    usage = resident_bytes + block_b * (per_row_io + per_row_act) + (4 << 20)  # + internal scratch
    cap = _vmem_capacity_bytes()
    vmem_limit = int(max(16 << 20, min(0.85 * cap, usage + (8 << 20))))

    cost = pl.CostEstimate(
        flops=2 * B * w_elems,
        transcendentals=B * (Lp + Np),
        bytes_accessed=int(2 * B * Np * 4 + w_elems * itemsize + bias_bytes),
    )

    out_p = pl.pallas_call(
        vanilla_ae_kernel,
        out_shape=jax.ShapeDtypeStruct((B, Np), jnp.float32),
        grid_spec=pltpu.PrefetchScalarGridSpec(
            num_scalar_prefetch=0,
            grid=grid,
            in_specs=[
                pl.BlockSpec((block_b, Np), lambda i: (i, 0)),
                resident_spec(w1), resident_spec(b1),
                resident_spec(w2), resident_spec(b2),
                resident_spec(w3), resident_spec(b3),
                resident_spec(w4), resident_spec(b4),
            ],
            out_specs=pl.BlockSpec((block_b, Np), lambda i: (i, 0)),
        ),
        compiler_params=pltpu.CompilerParams(
            dimension_semantics=("parallel",),
            vmem_limit_bytes=vmem_limit,
        ),
        cost_estimate=cost,
    )(x_p, w1, b1, w2, b2, w3, b3, w4, b4)

    return out_p if Np == native_dim else out_p[:, :native_dim]


# ---------------------------------------------------------------------------
# Public forward: budget-driven batch tiling + single-buffer fallback.
# ---------------------------------------------------------------------------
def vanilla_ae_forward(x, padded_params, block_b=None):
    """x: (B, native_dim) float32 (unpadded). padded_params from pad_params()."""
    global _SINGLE_BUFFER_OK
    B, native_dim = x.shape
    w1, b1 = padded_params["w1"], padded_params["b1"]
    w2, b2 = padded_params["w2"], padded_params["b2"]
    w3, b3 = padded_params["w3"], padded_params["b3"]
    w4, b4 = padded_params["w4"], padded_params["b4"]

    Np, Hp = w1.shape
    Lp = w2.shape[1]
    assert w3.shape == (Lp, Hp) and w4.shape == (Hp, Np)
    assert Np % _LANE == 0 and Hp % _LANE == 0 and Lp % _LANE == 0
    assert native_dim <= Np

    itemsize = jnp.dtype(w1.dtype).itemsize
    mult = 16 if itemsize < 4 else 8            # bf16 native tile is (16,128)

    if block_b is None:
        # Biggest batch tile that fits ~80% of this generation's VMEM, counting
        # single-buffered resident weights, double-buffered IO and live activations.
        budget = int(0.80 * _vmem_capacity_bytes())
        w_elems = Np * Hp + Hp * Lp + Lp * Hp + Hp * Np
        resident = w_elems * itemsize + (2 * Hp + Lp + Np) * 4
        per_row = (2 * Np * 4 * 2) + Np * itemsize + (2 * Hp + Lp) * (4 + itemsize) + Np * 4
        avail = budget - resident - (6 << 20)
        max_rows = max(mult, avail // per_row) if avail > 0 else mult
        cap_rows = max(mult, min(1024, (max_rows // mult) * mult))
        if B > cap_rows:
            block_b = cap_rows                               # must split: VMEM-bound tile size
        elif B >= 512:
            block_b = _round_up(-(-B // 2), mult)            # 2 steps of >=256 rows (both TCs busy)
        else:
            block_b = B                                      # small batch: one well-filled step

    block_b = min(_round_up(max(int(block_b), 1), mult), _round_up(B, mult))

    args = (x.astype(jnp.float32), w1, b1, w2, b2, w3, b3, w4, b4)

    if _SINGLE_BUFFER_OK is None:
        _SINGLE_BUFFER_OK = _HAS_BUFFERED
    if _SINGLE_BUFFER_OK:
        try:
            return _vanilla_ae_pallas(*args, block_b=block_b, single_buffer_weights=True)
        except Exception:
            _SINGLE_BUFFER_OK = False   # runtime rejected Buffered(1); remember the fallback
    return _vanilla_ae_pallas(*args, block_b=block_b, single_buffer_weights=False)


# ---------------------------------------------------------------------------
# Params: unpadded init (matches nn.Linear default), then one-time pad + cast.
# ---------------------------------------------------------------------------
def init_params(key, native_dim, latent_dim, hidden_layer, dtype=jnp.float32):
    """Weights stored as (in, out) = PyTorch W.T; biases as (1, out)."""
    ks = jax.random.split(key, 8)

    def linear(kw, kb, fan_in, fan_out):
        bound = 1.0 / jnp.sqrt(fan_in)
        w = jax.random.uniform(kw, (fan_in, fan_out), dtype, -bound, bound)
        b = jax.random.uniform(kb, (1, fan_out), dtype, -bound, bound)
        return w, b

    w1, b1 = linear(ks[0], ks[1], native_dim, hidden_layer)
    w2, b2 = linear(ks[2], ks[3], hidden_layer, latent_dim)
    w3, b3 = linear(ks[4], ks[5], latent_dim, hidden_layer)
    w4, b4 = linear(ks[6], ks[7], hidden_layer, native_dim)
    return dict(w1=w1, b1=b1, w2=w2, b2=b2, w3=w3, b3=b3, w4=w4, b4=b4)


def pad_params(params, compute_dtype=jnp.bfloat16, lane=_LANE):
    """One-time prep: zero-pad every feature dim to a lane multiple (exact) and
    pre-cast weights to the MXU compute dtype. Biases stay f32 (f32 epilogue)."""
    def pad_w(w):
        i, o = w.shape
        w = jnp.pad(w, ((0, _round_up(i, lane) - i), (0, _round_up(o, lane) - o)))
        return w.astype(compute_dtype)

    def pad_b(b):
        o = b.shape[-1]
        return jnp.pad(b, ((0, 0), (0, _round_up(o, lane) - o))).astype(jnp.float32)

    return {k: (pad_w(v) if k.startswith("w") else pad_b(v)) for k, v in params.items()}


def vanilla_ae_reference(x, params):
    """Pure-JAX reference on the UNPADDED params (verifies padding is exact)."""
    def leaky(v):
        return jnp.maximum(v, 0.2 * v)
    h1 = leaky(x @ params["w1"] + params["b1"])
    z = jnp.tanh(h1 @ params["w2"] + params["b2"])
    h2 = leaky(z @ params["w3"] + params["b3"])
    return jnp.tanh(h2 @ params["w4"] + params["b4"])


if __name__ == "__main__":
    native_dim, latent_dim, hidden_layer = 64, 8, 32
    batch = 16

    key = jax.random.PRNGKey(0)
    k_params, k_x = jax.random.split(key)
    params = init_params(k_params, native_dim, latent_dim, hidden_layer)
    x = jax.random.normal(k_x, (batch, native_dim), jnp.float32)

    ref = vanilla_ae_reference(x, params)

    # f32 operand path: exact vs reference (checks that lane padding is exact).
    padded_f32 = pad_params(params, compute_dtype=jnp.float32)
    out_f32 = jax.block_until_ready(vanilla_ae_forward(x, padded_f32))
    assert out_f32.shape == (batch, native_dim), out_f32.shape
    assert jnp.allclose(out_f32, ref, atol=1e-5, rtol=1e-5), "f32 kernel mismatch vs reference"

    # Default bf16 operand path (all generations incl. v5e): f32 accumulation and
    # f32 nonlinearities -> only operand rounding error, loose tolerance.
    padded_bf16 = pad_params(params, compute_dtype=jnp.bfloat16)
    out_bf16 = jax.block_until_ready(vanilla_ae_forward(x, padded_bf16))
    assert out_bf16.shape == (batch, native_dim), out_bf16.shape
    assert jnp.allclose(out_bf16, ref, atol=5e-2, rtol=5e-2), "bf16 kernel mismatch"

    print("KERNEL_OK")
</pallas_src>

<mosaic_0001>
module attributes {stable_mosaic.version = 11 : i64} {
  func.func @vanilla_ae_kernel(%arg0: i32, %arg1: memref<16x128xf32, #tpu.memory_space<vmem>>, %arg2: memref<128x128xf32, #tpu.memory_space<vmem>>, %arg3: memref<1x128xf32, #tpu.memory_space<vmem>>, %arg4: memref<128x128xf32, #tpu.memory_space<vmem>>, %arg5: memref<1x128xf32, #tpu.memory_space<vmem>>, %arg6: memref<128x128xf32, #tpu.memory_space<vmem>>, %arg7: memref<1x128xf32, #tpu.memory_space<vmem>>, %arg8: memref<128x128xf32, #tpu.memory_space<vmem>>, %arg9: memref<1x128xf32, #tpu.memory_space<vmem>>, %arg10: memref<16x128xf32, #tpu.memory_space<vmem>>) attributes {dimension_semantics = [#tpu.dimension_semantics<parallel>], iteration_bounds = array<i64: 1>, scalar_prefetch = 0 : i64, scratch_operands = 0 : i64, tpu.core_type = #tpu.core_type<tc>, window_params = [{transform_indices = @transform_0, window_bounds = array<i64: 16, 128>}, {pipeline_mode = #tpu.pipeline_mode<synchronous>, transform_indices = @transform_1, window_bounds = array<i64: 128, 128>}, {pipeline_mode = #tpu.pipeline_mode<synchronous>, transform_indices = @transform_2, window_bounds = array<i64: 1, 128>}, {pipeline_mode = #tpu.pipeline_mode<synchronous>, transform_indices = @transform_3, window_bounds = array<i64: 128, 128>}, {pipeline_mode = #tpu.pipeline_mode<synchronous>, transform_indices = @transform_4, window_bounds = array<i64: 1, 128>}, {pipeline_mode = #tpu.pipeline_mode<synchronous>, transform_indices = @transform_5, window_bounds = array<i64: 128, 128>}, {pipeline_mode = #tpu.pipeline_mode<synchronous>, transform_indices = @transform_6, window_bounds = array<i64: 1, 128>}, {pipeline_mode = #tpu.pipeline_mode<synchronous>, transform_indices = @transform_7, window_bounds = array<i64: 128, 128>}, {pipeline_mode = #tpu.pipeline_mode<synchronous>, transform_indices = @transform_8, window_bounds = array<i64: 1, 128>}, {transform_indices = @transform_9, window_bounds = array<i64: 16, 128>}]} {
    %c0 = arith.constant 0 : index
    %c0_0 = arith.constant 0 : index
    %0 = vector.load %arg1[%c0, %c0_0] : memref<16x128xf32, #tpu.memory_space<vmem>>, vector<16x128xf32>
    %c0_1 = arith.constant 0 : index
    %c0_2 = arith.constant 0 : index
    %1 = vector.load %arg2[%c0_1, %c0_2] : memref<128x128xf32, #tpu.memory_space<vmem>>, vector<128x128xf32>
    %cst = arith.constant dense<0.000000e+00> : vector<16x128xf32>
    %2 = tpu.matmul %0, %1, %cst {dimension_numbers = #tpu.dot_dimension_numbers<[1], [0], [0], [1], [0, 0, 1, 1], [], []>} : vector<16x128xf32>, vector<128x128xf32>, vector<16x128xf32> -> vector<16x128xf32>
    %c0_3 = arith.constant 0 : index
    %c0_4 = arith.constant 0 : index
    %3 = vector.load %arg3[%c0_3, %c0_4] : memref<1x128xf32, #tpu.memory_space<vmem>>, vector<1x128xf32>
    %4 = vector.broadcast %3 : vector<1x128xf32> to vector<16x128xf32>
    %5 = arith.addf %2, %4 : vector<16x128xf32>
    %cst_5 = arith.constant 2.000000e-01 : f32
    %6 = vector.broadcast %cst_5 : f32 to vector<16x128xf32>
    %7 = arith.mulf %6, %5 : vector<16x128xf32>
    %8 = arith.maximumf %5, %7 : vector<16x128xf32>
    %c0_6 = arith.constant 0 : index
    %c0_7 = arith.constant 0 : index
    %9 = vector.load %arg4[%c0_6, %c0_7] : memref<128x128xf32, #tpu.memory_space<vmem>>, vector<128x128xf32>
    %cst_8 = arith.constant dense<0.000000e+00> : vector<16x128xf32>
    %10 = tpu.matmul %8, %9, %cst_8 {dimension_numbers = #tpu.dot_dimension_numbers<[1], [0], [0], [1], [0, 0, 1, 1], [], []>} : vector<16x128xf32>, vector<128x128xf32>, vector<16x128xf32> -> vector<16x128xf32>
    %c0_9 = arith.constant 0 : index
    %c0_10 = arith.constant 0 : index
    %11 = vector.load %arg5[%c0_9, %c0_10] : memref<1x128xf32, #tpu.memory_space<vmem>>, vector<1x128xf32>
    %12 = vector.broadcast %11 : vector<1x128xf32> to vector<16x128xf32>
    %13 = arith.addf %10, %12 : vector<16x128xf32>
    %14 = math.tanh %13 : vector<16x128xf32>
    %c0_11 = arith.constant 0 : index
    %c0_12 = arith.constant 0 : index
    %15 = vector.load %arg6[%c0_11, %c0_12] : memref<128x128xf32, #tpu.memory_space<vmem>>, vector<128x128xf32>
    %cst_13 = arith.constant dense<0.000000e+00> : vector<16x128xf32>
    %16 = tpu.matmul %14, %15, %cst_13 {dimension_numbers = #tpu.dot_dimension_numbers<[1], [0], [0], [1], [0, 0, 1, 1], [], []>} : vector<16x128xf32>, vector<128x128xf32>, vector<16x128xf32> -> vector<16x128xf32>
    %c0_14 = arith.constant 0 : index
    %c0_15 = arith.constant 0 : index
    %17 = vector.load %arg7[%c0_14, %c0_15] : memref<1x128xf32, #tpu.memory_space<vmem>>, vector<1x128xf32>
    %18 = vector.broadcast %17 : vector<1x128xf32> to vector<16x128xf32>
    %19 = arith.addf %16, %18 : vector<16x128xf32>
    %cst_16 = arith.constant 2.000000e-01 : f32
    %20 = vector.broadcast %cst_16 : f32 to vector<16x128xf32>
    %21 = arith.mulf %20, %19 : vector<16x128xf32>
    %22 = arith.maximumf %19, %21 : vector<16x128xf32>
    %c0_17 = arith.constant 0 : index
    %c0_18 = arith.constant 0 : index
    %23 = vector.load %arg8[%c0_17, %c0_18] : memref<128x128xf32, #tpu.memory_space<vmem>>, vector<128x128xf32>
    %cst_19 = arith.constant dense<0.000000e+00> : vector<16x128xf32>
    %24 = tpu.matmul %22, %23, %cst_19 {dimension_numbers = #tpu.dot_dimension_numbers<[1], [0], [0], [1], [0, 0, 1, 1], [], []>} : vector<16x128xf32>, vector<128x128xf32>, vector<16x128xf32> -> vector<16x128xf32>
    %c0_20 = arith.constant 0 : index
    %c0_21 = arith.constant 0 : index
    %25 = vector.load %arg9[%c0_20, %c0_21] : memref<1x128xf32, #tpu.memory_space<vmem>>, vector<1x128xf32>
    %26 = vector.broadcast %25 : vector<1x128xf32> to vector<16x128xf32>
    %27 = arith.addf %24, %26 : vector<16x128xf32>
    %28 = math.tanh %27 : vector<16x128xf32>
    %c0_22 = arith.constant 0 : index
    %c0_23 = arith.constant 0 : index
    %29 = vector.load %arg10[%c0_22, %c0_23] : memref<16x128xf32, #tpu.memory_space<vmem>>, vector<16x128xf32>
    tpu.vector_store %arg10[%c0_22, %c0_23], %28 {strides = array<i32>} : memref<16x128xf32, #tpu.memory_space<vmem>>, vector<16x128xf32>,
    return
  }
  func.func @transform_0(%arg0: i32) -> (i32, i32) {
    %c0_i32 = arith.constant 0 : i32
    %c0_i32_0 = arith.constant 0 : i32
    return %arg0, %c0_i32 : i32, i32
  }
  func.func @transform_1(%arg0: i32) -> (i32, i32) {
    %c0_i32 = arith.constant 0 : i32
    %c0_i32_0 = arith.constant 0 : i32
    %c0_i32_1 = arith.constant 0 : i32
    return %c0_i32, %c0_i32_0 : i32, i32
  }
  func.func @transform_2(%arg0: i32) -> (i32, i32) {
    %c0_i32 = arith.constant 0 : i32
    %c0_i32_0 = arith.constant 0 : i32
    %c0_i32_1 = arith.constant 0 : i32
    return %c0_i32, %c0_i32_0 : i32, i32
  }
  func.func @transform_3(%arg0: i32) -> (i32, i32) {
    %c0_i32 = arith.constant 0 : i32
    %c0_i32_0 = arith.constant 0 : i32
    %c0_i32_1 = arith.constant 0 : i32
    return %c0_i32, %c0_i32_0 : i32, i32
  }
  func.func @transform_4(%arg0: i32) -> (i32, i32) {
    %c0_i32 = arith.constant 0 : i32
    %c0_i32_0 = arith.constant 0 : i32
    %c0_i32_1 = arith.constant 0 : i32
    return %c0_i32, %c0_i32_0 : i32, i32
  }
  func.func @transform_5(%arg0: i32) -> (i32, i32) {
    %c0_i32 = arith.constant 0 : i32
    %c0_i32_0 = arith.constant 0 : i32
    %c0_i32_1 = arith.constant 0 : i32
    return %c0_i32, %c0_i32_0 : i32, i32
  }
  func.func @transform_6(%arg0: i32) -> (i32, i32) {
    %c0_i32 = arith.constant 0 : i32
    %c0_i32_0 = arith.constant 0 : i32
    %c0_i32_1 = arith.constant 0 : i32
    return %c0_i32, %c0_i32_0 : i32, i32
  }
  func.func @transform_7(%arg0: i32) -> (i32, i32) {
    %c0_i32 = arith.constant 0 : i32
    %c0_i32_0 = arith.constant 0 : i32
    %c0_i32_1 = arith.constant 0 : i32
    return %c0_i32, %c0_i32_0 : i32, i32
  }
  func.func @transform_8(%arg0: i32) -> (i32, i32) {
    %c0_i32 = arith.constant 0 : i32
    %c0_i32_0 = arith.constant 0 : i32
    %c0_i32_1 = arith.constant 0 : i32
    return %c0_i32, %c0_i32_0 : i32, i32
  }
  func.func @transform_9(%arg0: i32) -> (i32, i32) {
    %c0_i32 = arith.constant 0 : i32
    %c0_i32_0 = arith.constant 0 : i32
    return %arg0, %c0_i32 : i32, i32
  }
}

module attributes {stable_mosaic.version = 11 : i64} {
  func.func @vanilla_ae_kernel(%arg0: i32, %arg1: memref<16x128xf32, #tpu.memory_space<vmem>>, %arg2: memref<128x128xf32, #tpu.memory_space<vmem>>, %arg3: memref<1x128xf32, #tpu.memory_space<vmem>>, %arg4: memref<128x128xf32, #tpu.memory_space<vmem>>, %arg5: memref<1x128xf32, #tpu.memory_space<vmem>>, %arg6: memref<128x128xf32, #tpu.memory_space<vmem>>, %arg7: memref<1x128xf32, #tpu.memory_space<vmem>>, %arg8: memref<128x128xf32, #tpu.memory_space<vmem>>, %arg9: memref<1x128xf32, #tpu.memory_space<vmem>>, %arg10: memref<16x128xf32, #tpu.memory_space<vmem>>) attributes {dimension_semantics = [#tpu.dimension_semantics<parallel>], iteration_bounds = array<i64: 1>, scalar_prefetch = 0 : i64, scratch_operands = 0 : i64, tpu.core_type = #tpu.core_type<tc>, window_params = [{transform_indices = @transform_0, window_bounds = array<i64: 16, 128>}, {pipeline_mode = #tpu.pipeline_mode<synchronous>, transform_indices = @transform_1, window_bounds = array<i64: 128, 128>}, {pipeline_mode = #tpu.pipeline_mode<synchronous>, transform_indices = @transform_2, window_bounds = array<i64: 1, 128>}, {pipeline_mode = #tpu.pipeline_mode<synchronous>, transform_indices = @transform_3, window_bounds = array<i64: 128, 128>}, {pipeline_mode = #tpu.pipeline_mode<synchronous>, transform_indices = @transform_4, window_bounds = array<i64: 1, 128>}, {pipeline_mode = #tpu.pipeline_mode<synchronous>, transform_indices = @transform_5, window_bounds = array<i64: 128, 128>}, {pipeline_mode = #tpu.pipeline_mode<synchronous>, transform_indices = @transform_6, window_bounds = array<i64: 1, 128>}, {pipeline_mode = #tpu.pipeline_mode<synchronous>, transform_indices = @transform_7, window_bounds = array<i64: 128, 128>}, {pipeline_mode = #tpu.pipeline_mode<synchronous>, transform_indices = @transform_8, window_bounds = array<i64: 1, 128>}, {transform_indices = @transform_9, window_bounds = array<i64: 16, 128>}]} {
    %c0 = arith.constant 0 : index
    %c0_0 = arith.constant 0 : index
    %0 = vector.load %arg1[%c0, %c0_0] : memref<16x128xf32, #tpu.memory_space<vmem>>, vector<16x128xf32>
    %c0_1 = arith.constant 0 : index
    %c0_2 = arith.constant 0 : index
    %1 = vector.load %arg2[%c0_1, %c0_2] : memref<128x128xf32, #tpu.memory_space<vmem>>, vector<128x128xf32>
    %cst = arith.constant dense<0.000000e+00> : vector<16x128xf32>
    %2 = tpu.matmul %0, %1, %cst {dimension_numbers = #tpu.dot_dimension_numbers<[1], [0], [0], [1], [0, 0, 1, 1], [], []>} : vector<16x128xf32>, vector<128x128xf32>, vector<16x128xf32> -> vector<16x128xf32>
    %c0_3 = arith.constant 0 : index
    %c0_4 = arith.constant 0 : index
    %3 = vector.load %arg3[%c0_3, %c0_4] : memref<1x128xf32, #tpu.memory_space<vmem>>, vector<1x128xf32>
    %4 = vector.broadcast %3 : vector<1x128xf32> to vector<16x128xf32>
    %5 = arith.addf %2, %4 : vector<16x128xf32>
    %cst_5 = arith.constant 2.000000e-01 : f32
    %6 = vector.broadcast %cst_5 : f32 to vector<16x128xf32>
    %7 = arith.mulf %6, %5 : vector<16x128xf32>
    %8 = arith.maximumf %5, %7 : vector<16x128xf32>
    %c0_6 = arith.constant 0 : index
    %c0_7 = arith.constant 0 : index
    %9 = vector.load %arg4[%c0_6, %c0_7] : memref<128x128xf32, #tpu.memory_space<vmem>>, vector<128x128xf32>
    %cst_8 = arith.constant dense<0.000000e+00> : vector<16x128xf32>
    %10 = tpu.matmul %8, %9, %cst_8 {dimension_numbers = #tpu.dot_dimension_numbers<[1], [0], [0], [1], [0, 0, 1, 1], [], []>} : vector<16x128xf32>, vector<128x128xf32>, vector<16x128xf32> -> vector<16x128xf32>
    %c0_9 = arith.constant 0 : index
    %c0_10 = arith.constant 0 : index
    %11 = vector.load %arg5[%c0_9, %c0_10] : memref<1x128xf32, #tpu.memory_space<vmem>>, vector<1x128xf32>
    %12 = vector.broadcast %11 : vector<1x128xf32> to vector<16x128xf32>
    %13 = arith.addf %10, %12 : vector<16x128xf32>
    %14 = math.tanh %13 : vector<16x128xf32>
    %c0_11 = arith.constant 0 : index
    %c0_12 = arith.constant 0 : index
    %15 = vector.load %arg6[%c0_11, %c0_12] : memref<128x128xf32, #tpu.memory_space<vmem>>, vector<128x128xf32>
    %cst_13 = arith.constant dense<0.000000e+00> : vector<16x128xf32>
    %16 = tpu.matmul %14, %15, %cst_13 {dimension_numbers = #tpu.dot_dimension_numbers<[1], [0], [0], [1], [0, 0, 1, 1], [], []>} : vector<16x128xf32>, vector<128x128xf32>, vector<16x128xf32> -> vector<16x128xf32>
    %c0_14 = arith.constant 0 : index
    %c0_15 = arith.constant 0 : index
    %17 = vector.load %arg7[%c0_14, %c0_15] : memref<1x128xf32, #tpu.memory_space<vmem>>, vector<1x128xf32>
    %18 = vector.broadcast %17 : vector<1x128xf32> to vector<16x128xf32>
    %19 = arith.addf %16, %18 : vector<16x128xf32>
    %cst_16 = arith.constant 2.000000e-01 : f32
    %20 = vector.broadcast %cst_16 : f32 to vector<16x128xf32>
    %21 = arith.mulf %20, %19 : vector<16x128xf32>
    %22 = arith.maximumf %19, %21 : vector<16x128xf32>
    %c0_17 = arith.constant 0 : index
    %c0_18 = arith.constant 0 : index
    %23 = vector.load %arg8[%c0_17, %c0_18] : memref<128x128xf32, #tpu.memory_space<vmem>>, vector<128x128xf32>
    %cst_19 = arith.constant dense<0.000000e+00> : vector<16x128xf32>
    %24 = tpu.matmul %22, %23, %cst_19 {dimension_numbers = #tpu.dot_dimension_numbers<[1], [0], [0], [1], [0, 0, 1, 1], [], []>} : vector<16x128xf32>, vector<128x128xf32>, vector<16x128xf32> -> vector<16x128xf32>
    %c0_20 = arith.constant 0 : index
    %c0_21 = arith.constant 0 : index
    %25 = vector.load %arg9[%c0_20, %c0_21] : memref<1x128xf32, #tpu.memory_space<vmem>>, vector<1x128xf32>
    %26 = vector.broadcast %25 : vector<1x128xf32> to vector<16x128xf32>
    %27 = arith.addf %24, %26 : vector<16x128xf32>
    %28 = math.tanh %27 : vector<16x128xf32>
    %c0_22 = arith.constant 0 : index
    %c0_23 = arith.constant 0 : index
    %29 = vector.load %arg10[%c0_22, %c0_23] : memref<16x128xf32, #tpu.memory_space<vmem>>, vector<16x128xf32>
    tpu.vector_store %arg10[%c0_22, %c0_23], %28 {strides = array<i32>} : memref<16x128xf32, #tpu.memory_space<vmem>>, vector<16x128xf32>,
    return
  }
  func.func @transform_0(%arg0: i32) -> (i32, i32) {
    %c0_i32 = arith.constant 0 : i32
    %c0_i32_0 = arith.constant 0 : i32
    return %arg0, %c0_i32 : i32, i32
  }
  func.func @transform_1(%arg0: i32) -> (i32, i32) {
    %c0_i32 = arith.constant 0 : i32
    %c0_i32_0 = arith.constant 0 : i32
    %c0_i32_1 = arith.constant 0 : i32
    return %c0_i32, %c0_i32_0 : i32, i32
  }
  func.func @transform_2(%arg0: i32) -> (i32, i32) {
    %c0_i32 = arith.constant 0 : i32
    %c0_i32_0 = arith.constant 0 : i32
    %c0_i32_1 = arith.constant 0 : i32
    return %c0_i32, %c0_i32_0 : i32, i32
  }
  func.func @transform_3(%arg0: i32) -> (i32, i32) {
    %c0_i32 = arith.constant 0 : i32
    %c0_i32_0 = arith.constant 0 : i32
    %c0_i32_1 = arith.constant 0 : i32
    return %c0_i32, %c0_i32_0 : i32, i32
  }
  func.func @transform_4(%arg0: i32) -> (i32, i32) {
    %c0_i32 = arith.constant 0 : i32
    %c0_i32_0 = arith.constant 0 : i32
    %c0_i32_1 = arith.constant 0 : i32
    return %c0_i32, %c0_i32_0 : i32, i32
  }
  func.func @transform_5(%arg0: i32) -> (i32, i32) {
    %c0_i32 = arith.constant 0 : i32
    %c0_i32_0 = arith.constant 0 : i32
    %c0_i32_1 = arith.constant 0 : i32
    return %c0_i32, %c0_i32_0 : i32, i32
  }
  func.func @transform_6(%arg0: i32) -> (i32, i32) {
    %c0_i32 = arith.constant 0 : i32
    %c0_i32_0 = arith.constant 0 : i32
    %c0_i32_1 = arith.constant 0 : i32
    return %c0_i32, %c0_i32_0 : i32, i32
  }
  func.func @transform_7(%arg0: i32) -> (i32, i32) {
    %c0_i32 = arith.constant 0 : i32
    %c0_i32_0 = arith.constant 0 : i32
    %c0_i32_1 = arith.constant 0 : i32
    return %c0_i32, %c0_i32_0 : i32, i32
  }
  func.func @transform_8(%arg0: i32) -> (i32, i32) {
    %c0_i32 = arith.constant 0 : i32
    %c0_i32_0 = arith.constant 0 : i32
    %c0_i32_1 = arith.constant 0 : i32
    return %c0_i32, %c0_i32_0 : i32, i32
  }
  func.func @transform_9(%arg0: i32) -> (i32, i32) {
    %c0_i32 = arith.constant 0 : i32
    %c0_i32_0 = arith.constant 0 : i32
    return %arg0, %c0_i32 : i32, i32
  }
}

</mosaic_0001>

<llo_original>
// kernel: _vanilla_ae_pallas.1
$region0: #{_vanilla_ae_pallas.1}
  #allocation0 [shape = 'u32[]', space=smem, size = 0x4, offset = 0x4, fixed_abs, tag = 'smem constant byte address 0x4 - core index']
  #allocation1 [shape = 'u32[144,128]{1,0:T(1,128)}', space=vmem, size = 0x12000, scoped, tag = 'internal scratch']
  %s0 = inlined_call_operand.vmem [shape: f32[16,128], index: 0, kind: input, shape index: {}]
  %s1 = inlined_call_operand.hbm [shape: f32[128,128], index: 1, kind: input, shape index: {}]
  %s2 = inlined_call_operand.vmem [shape: f32[1,128], index: 2, kind: input, shape index: {}]
  %s3 = inlined_call_operand.hbm [shape: f32[128,128], index: 3, kind: input, shape index: {}]
  %s4 = inlined_call_operand.vmem [shape: f32[1,128], index: 4, kind: input, shape index: {}]
  %s5 = inlined_call_operand.hbm [shape: f32[128,128], index: 5, kind: input, shape index: {}]
  %s6 = inlined_call_operand.vmem [shape: f32[1,128], index: 6, kind: input, shape index: {}]
  %s7 = inlined_call_operand.hbm [shape: f32[128,128], index: 7, kind: input, shape index: {}]
  %s8 = inlined_call_operand.vmem [shape: f32[1,128], index: 8, kind: input, shape index: {}]
  %s9 = inlined_call_operand.hbm [shape: f32[16,128], index: 9, kind: output, shape index: {}]
  %s10 = sld [smem:[#allocation0]]
  $region62: #{_vanilla_ae_pallas.1} parent=0
    _
  %s12 = ssub.s32 1, %s10
  %s13 = scalar_select 0, %s12, %s10
  $region1: #{_vanilla_ae_pallas.1} parent=0
    #allocation2 [shape = 'u8[65536]{0}', space=vmem, size = 0x10000, scoped, tag = 'input window, operand 1, single buffered']
    #allocation3 [shape = 's32[1]{0}', space=sflag, size = 0x4, scoped, tag = 'scoped memory for _vanilla_ae_pallas.1']
    #allocation4 [shape = 's32[1]{0}', space=sflag, size = 0x4, scoped, tag = 'scoped memory for _vanilla_ae_pallas.1']
    #allocation5 [shape = 'u8[65536]{0}', space=vmem, size = 0x10000, scoped, tag = 'input window, operand 3, single buffered']
    #allocation6 [shape = 's32[1]{0}', space=sflag, size = 0x4, scoped, tag = 'scoped memory for _vanilla_ae_pallas.1']
    #allocation7 [shape = 'u8[65536]{0}', space=vmem, size = 0x10000, scoped, tag = 'input window, operand 5, single buffered']
    #allocation8 [shape = 'u8[65536]{0}', space=vmem, size = 0x10000, scoped, tag = 'input window, operand 7, single buffered']
    #allocation9 [shape = 's32[1]{0}', space=sflag, size = 0x4, scoped, tag = 'scoped memory for _vanilla_ae_pallas.1']
    #allocation10 [shape = 'u8[8192]{0}', space=vmem, size = 0x2000, scoped, tag = 'output window, operand 0, single buffered']
    %14 = vsyncpa [#allocation3], 0
    %15 = vsyncpa [#allocation6], 0
    %16 = vsyncpa [#allocation9], 0
    %17 = vsyncpa [#allocation4], 0
    // Predicated region
    $region2: #{_vanilla_ae_pallas.1} parent=1 // pred_check
      _
    $region3: #{_vanilla_ae_pallas.1} parent=1 // pred_check_branch
      %19 = sbr.rel (0) target = $region5
    $region4: #{_vanilla_ae_pallas.1} parent=1 // pred_region
      _
    $region5: #{_vanilla_ae_pallas.1} parent=1 // pred_fallthru
      _
    // Predicated region
    $region6: #{_vanilla_ae_pallas.1} parent=1 // pred_check
      _
    $region7: #{_vanilla_ae_pallas.1} parent=1 // pred_check_branch
      %21 = sbr.rel (0) target = $region9
    $region8: #{_vanilla_ae_pallas.1} parent=1 // pred_region
      %s23 = ssub.s32 2048, 2048
      %24 = vsyncadd [#allocation3], %s23
      %s25 = sshll.u32 [#allocation2], 4
      %s26 = int_to_ptr.vmem [resolvable:$true] %s25
      %31 = dma.hbm_to_vmem [thread:$0]  %s1, 2048, %s26, [#allocation3], 128, 128, 8
    $region9: #{_vanilla_ae_pallas.1} parent=1 // pred_fallthru
      _
    // Predicated region
    $region10: #{_vanilla_ae_pallas.1} parent=1 // pred_check
      _
    $region11: #{_vanilla_ae_pallas.1} parent=1 // pred_check_branch
      %33 = sbr.rel (0) target = $region13
    $region12: #{_vanilla_ae_pallas.1} parent=1 // pred_region
      _
    $region13: #{_vanilla_ae_pallas.1} parent=1 // pred_fallthru
      _
    // Predicated region
    $region14: #{_vanilla_ae_pallas.1} parent=1 // pred_check
      _
    $region15: #{_vanilla_ae_pallas.1} parent=1 // pred_check_branch
      %35 = sbr.rel (0) target = $region17
    $region16: #{_vanilla_ae_pallas.1} parent=1 // pred_region
      %s37 = ssub.s32 2048, 2048
      %38 = vsyncadd [#allocation6], %s37
      %s39 = sshll.u32 [#allocation5], 4
      %s40 = int_to_ptr.vmem [resolvable:$true] %s39
      %45 = dma.hbm_to_vmem [thread:$0]  %s3, 2048, %s40, [#allocation6], 128, 128, 8
    $region17: #{_vanilla_ae_pallas.1} parent=1 // pred_fallthru
      _
    // Predicated region
    $region18: #{_vanilla_ae_pallas.1} parent=1 // pred_check
      _
    $region19: #{_vanilla_ae_pallas.1} parent=1 // pred_check_branch
      %47 = sbr.rel (0) target = $region21
    $region20: #{_vanilla_ae_pallas.1} parent=1 // pred_region
      _
    $region21: #{_vanilla_ae_pallas.1} parent=1 // pred_fallthru
      _
    // Predicated region
    $region22: #{_vanilla_ae_pallas.1} parent=1 // pred_check
      _
    $region23: #{_vanilla_ae_pallas.1} parent=1 // pred_check_branch
      %49 = sbr.rel (0) target = $region25
    $region24: #{_vanilla_ae_pallas.1} parent=1 // pred_region
      %s51 = ssub.s32 2048, 2048
      %52 = vsyncadd [#allocation6], %s51
      %s53 = sshll.u32 [#allocation7], 4
      %s54 = int_to_ptr.vmem [resolvable:$true] %s53
      %59 = dma.hbm_to_vmem [thread:$0]  %s5, 2048, %s54, [#allocation6], 128, 128, 8
    $region25: #{_vanilla_ae_pallas.1} parent=1 // pred_fallthru
      _
    // Predicated region
    $region26: #{_vanilla_ae_pallas.1} parent=1 // pred_check
      _
    $region27: #{_vanilla_ae_pallas.1} parent=1 // pred_check_branch
      %61 = sbr.rel (0) target = $region29
    $region28: #{_vanilla_ae_pallas.1} parent=1 // pred_region
      _
    $region29: #{_vanilla_ae_pallas.1} parent=1 // pred_fallthru
      _
    // Predicated region
    $region30: #{_vanilla_ae_pallas.1} parent=1 // pred_check
      _
    $region31: #{_vanilla_ae_pallas.1} parent=1 // pred_check_branch
      %63 = sbr.rel (0) target = $region33
    $region32: #{_vanilla_ae_pallas.1} parent=1 // pred_region
      %s65 = ssub.s32 2048, 2048
      %66 = vsyncadd [#allocation9], %s65
      %s67 = sshll.u32 [#allocation8], 4
      %s68 = int_to_ptr.vmem [resolvable:$true] %s67
      %73 = dma.hbm_to_vmem [thread:$0]  %s7, 2048, %s68, [#allocation9], 128, 128, 8
    $region33: #{_vanilla_ae_pallas.1} parent=1 // pred_fallthru
      _
    // Predicated region
    $region34: #{_vanilla_ae_pallas.1} parent=1 // pred_check
      _
    $region35: #{_vanilla_ae_pallas.1} parent=1 // pred_check_branch
      %75 = sbr.rel (0) target = $region37
    $region36: #{_vanilla_ae_pallas.1} parent=1 // pred_region
      _
    $region37: #{_vanilla_ae_pallas.1} parent=1 // pred_fallthru
      _
    // Predicated region
    $region38: #{_vanilla_ae_pallas.1} parent=1 // pred_check
      _
    $region39: #{_vanilla_ae_pallas.1} parent=1 // pred_check_branch
      %77 = sbr.rel (0) target = $region41
    $region40: #{_vanilla_ae_pallas.1} parent=1 // pred_region
      %78 = dma.done [#allocation3], 2048
    $region41: #{_vanilla_ae_pallas.1} parent=1 // pred_fallthru
      _
    // Predicated region
    $region42: #{_vanilla_ae_pallas.1} parent=1 // pred_check
      _
    $region43: #{_vanilla_ae_pallas.1} parent=1 // pred_check_branch
      %80 = sbr.rel (0) target = $region45
    $region44: #{_vanilla_ae_pallas.1} parent=1 // pred_region
      %81 = dma.done [#allocation6], 2048
    $region45: #{_vanilla_ae_pallas.1} parent=1 // pred_fallthru
      _
    // Predicated region
    $region46: #{_vanilla_ae_pallas.1} parent=1 // pred_check
      _
    $region47: #{_vanilla_ae_pallas.1} parent=1 // pred_check_branch
      %83 = sbr.rel (0) target = $region49
    $region48: #{_vanilla_ae_pallas.1} parent=1 // pred_region
      %84 = dma.done [#allocation6], 2048
    $region49: #{_vanilla_ae_pallas.1} parent=1 // pred_fallthru
      _
    // Predicated region
    $region50: #{_vanilla_ae_pallas.1} parent=1 // pred_check
      _
    $region51: #{_vanilla_ae_pallas.1} parent=1 // pred_check_branch
      %86 = sbr.rel (0) target = $region53
    $region52: #{_vanilla_ae_pallas.1} parent=1 // pred_region
      %87 = dma.done [#allocation9], 2048
    $region53: #{_vanilla_ae_pallas.1} parent=1 // pred_fallthru
      _
    %v88 = vld [vmem:[%s0] sm:$0xff]
    %v89 = vld [vmem:[%s0 + $0x8] sm:$0xff]
    %v90 = vld [vmem:[#allocation2] sm:$0xff]
    %v91 = vld [vmem:[#allocation2 + $0x8] sm:$0xff]
    %v92 = vld [vmem:[#allocation2 + $0x10] sm:$0xff]
    %v93 = vld [vmem:[#allocation2 + $0x18] sm:$0xff]
    %v94 = vld [vmem:[#allocation2 + $0x20] sm:$0xff]
    %v95 = vld [vmem:[#allocation2 + $0x28] sm:$0xff]
    %v96 = vld [vmem:[#allocation2 + $0x30] sm:$0xff]
    %v97 = vld [vmem:[#allocation2 + $0x38] sm:$0xff]
    %v98 = vld [vmem:[#allocation2 + $0x40] sm:$0xff]
    %v99 = vld [vmem:[#allocation2 + $0x48] sm:$0xff]
    %v100 = vld [vmem:[#allocation2 + $0x50] sm:$0xff]
    %v101 = vld [vmem:[#allocation2 + $0x58] sm:$0xff]
    %v102 = vld [vmem:[#allocation2 + $0x60] sm:$0xff]
    %v103 = vld [vmem:[#allocation2 + $0x68] sm:$0xff]
    %v104 = vld [vmem:[#allocation2 + $0x70] sm:$0xff]
    %v105 = vld [vmem:[#allocation2 + $0x78] sm:$0xff]
    %v106 = vld [vmem:[%s2] sm:$0x1]
    %v108 = vlaneseq
    %v109 = vshrl.u32 %v108, 7
    %v110 = vsub.s32 0, %v109
    %v111 = vrot.slane %v106, %v110
    %113 = vmatprep.subr.mxu0 0.0
    %114 = vmatpush1.msra.mxu0 %v90
    %115 = vmatprep.subr.mxu0 0.0
    %116 = vmatpush1.msra.mxu0 %v91
    %117 = vmatprep.subr.mxu0 0.0
    %118 = vmatpush1.msra.mxu0 %v92
    %119 = vmatprep.subr.mxu0 0.0
    %120 = vmatpush1.msra.mxu0 %v93
    %121 = vmatprep.subr.mxu0 0.0
    %122 = vmatpush1.msra.mxu0 %v94
    %123 = vmatprep.subr.mxu0 0.0
    %124 = vmatpush1.msra.mxu0 %v95
    %125 = vmatprep.subr.mxu0 0.0
    %126 = vmatpush1.msra.mxu0 %v96
    %127 = vmatprep.subr.mxu0 0.0
    %128 = vmatpush1.msra.mxu0 %v97
    %129 = vmatprep.subr.mxu0 0.0
    %130 = vmatpush1.msra.mxu0 %v98
    %131 = vmatprep.subr.mxu0 0.0
    %132 = vmatpush1.msra.mxu0 %v99
    %133 = vmatprep.subr.mxu0 0.0
    %134 = vmatpush1.msra.mxu0 %v100
    %135 = vmatprep.subr.mxu0 0.0
    %136 = vmatpush1.msra.mxu0 %v101
    %137 = vmatprep.subr.mxu0 0.0
    %138 = vmatpush1.msra.mxu0 %v102
    %139 = vmatprep.subr.mxu0 0.0
    %140 = vmatpush1.msra.mxu0 %v103
    %141 = vmatprep.subr.mxu0 0.0
    %142 = vmatpush1.msra.mxu0 %v104
    %143 = vmatprep.subr.mxu0 0.0
    %144 = vmatpush1.msra.mxu0 %v105
    %145 = vmatprep.subr.mxu0 0.0
    %146 = vmatpush1.msra.mxu0 0.0
    %147 = vmatprep.subr.mxu0 0.0
    %148 = vmatpush1.msra.mxu0 0.0
    %149 = vmatprep.subr.mxu0 0.0
    %150 = vmatpush1.msra.mxu0 0.0
    %151 = vmatprep.subr.mxu0 0.0
    %152 = vmatpush1.msra.mxu0 0.0
    %153 = vmatprep.subr.mxu0 0.0
    %154 = vmatpush1.msra.mxu0 0.0
    %155 = vmatprep.subr.mxu0 0.0
    %156 = vmatpush1.msra.mxu0 0.0
    %157 = vmatprep.subr.mxu0 0.0
    %158 = vmatpush1.msra.mxu0 0.0
    %159 = vmatprep.subr.mxu0 0.0
    %160 = vmatpush1.msra.mxu0 0.0
    %161 = vmatprep.subr.mxu0 0.0
    %162 = vmatpush1.msra.mxu0 0.0
    %163 = vmatprep.subr.mxu0 0.0
    %164 = vmatpush1.msra.mxu0 0.0
    %165 = vmatprep.subr.mxu0 0.0
    %166 = vmatpush1.msra.mxu0 0.0
    %167 = vmatprep.subr.mxu0 0.0
    %168 = vmatpush1.msra.mxu0 0.0
    %169 = vmatprep.subr.mxu0 0.0
    %170 = vmatpush1.msra.mxu0 0.0
    %171 = vmatprep.subr.mxu0 0.0
    %172 = vmatpush1.msra.mxu0 0.0
    %173 = vmatprep.subr.mxu0 0.0
    %174 = vmatpush1.msra.mxu0 0.0
    %175 = vmatprep.subr.mxu0 0.0
    %176 = vmatpush1.msra.mxu0 0.0
    %177 = vmatprep.mubr.f32.mxu0 0.0
    %178 = vmatmul.mubr.f32.gmra.mrb[0].mxu0 %v88
    %v179 = vpop.f32.mrb[0].mxu0
    %v180 = vadd.f32 %v111, %v179
    %v181 = vpop.f32.mrb[0].mxu0
    %182 = vmatprep.mubr.f32.mxu0 0.0
    %183 = vmatmul.mubr.f32.gmra.mrb[0].mxu0 %v89
    %v184 = vpop.f32.mrb[0].mxu0
    %v185 = vadd.f32 %v111, %v184
    %v186 = vpop.f32.mrb[0].mxu0
    %187 = vdwg.mxu0
    %v188 = vmul.f32 %v180, 0.2
    %v189 = vmul.f32 %v185, 0.2
    %v190 = vmax.f32 %v180, %v188
    %v191 = vmax.f32 %v185, %v189
    %v192 = vld [vmem:[#allocation5] sm:$0xff]
    %v193 = vld [vmem:[#allocation5 + $0x8] sm:$0xff]
    %v194 = vld [vmem:[#allocation5 + $0x10] sm:$0xff]
    %v195 = vld [vmem:[#allocation5 + $0x18] sm:$0xff]
    %v196 = vld [vmem:[#allocation5 + $0x20] sm:$0xff]
    %v197 = vld [vmem:[#allocation5 + $0x28] sm:$0xff]
    %v198 = vld [vmem:[#allocation5 + $0x30] sm:$0xff]
    %v199 = vld [vmem:[#allocation5 + $0x38] sm:$0xff]
    %v200 = vld [vmem:[#allocation5 + $0x40] sm:$0xff]
    %v201 = vld [vmem:[#allocation5 + $0x48] sm:$0xff]
    %v202 = vld [vmem:[#allocation5 + $0x50] sm:$0xff]
    %v203 = vld [vmem:[#allocation5 + $0x58] sm:$0xff]
    %v204 = vld [vmem:[#allocation5 + $0x60] sm:$0xff]
    %v205 = vld [vmem:[#allocation5 + $0x68] sm:$0xff]
    %v206 = vld [vmem:[#allocation5 + $0x70] sm:$0xff]
    %v207 = vld [vmem:[#allocation5 + $0x78] sm:$0xff]
    %v208 = vld [vmem:[%s4] sm:$0x1]
    %v210 = vlaneseq
    %v211 = vshrl.u32 %v210, 7
    %v212 = vsub.s32 0, %v211
    %v213 = vrot.slane %v208, %v212
    %215 = vmatprep.subr.mxu0 0.0
    %216 = vmatpush1.msra.mxu0 %v192
    %217 = vmatprep.subr.mxu0 0.0
    %218 = vmatpush1.msra.mxu0 %v193
    %219 = vmatprep.subr.mxu0 0.0
    %220 = vmatpush1.msra.mxu0 %v194
    %221 = vmatprep.subr.mxu0 0.0
    %222 = vmatpush1.msra.mxu0 %v195
    %223 = vmatprep.subr.mxu0 0.0
    %224 = vmatpush1.msra.mxu0 %v196
    %225 = vmatprep.subr.mxu0 0.0
    %226 = vmatpush1.msra.mxu0 %v197
    %227 = vmatprep.subr.mxu0 0.0
    %228 = vmatpush1.msra.mxu0 %v198
    %229 = vmatprep.subr.mxu0 0.0
    %230 = vmatpush1.msra.mxu0 %v199
    %231 = vmatprep.subr.mxu0 0.0
    %232 = vmatpush1.msra.mxu0 %v200
    %233 = vmatprep.subr.mxu0 0.0
    %234 = vmatpush1.msra.mxu0 %v201
    %235 = vmatprep.subr.mxu0 0.0
    %236 = vmatpush1.msra.mxu0 %v202
    %237 = vmatprep.subr.mxu0 0.0
    %238 = vmatpush1.msra.mxu0 %v203
    %239 = vmatprep.subr.mxu0 0.0
    %240 = vmatpush1.msra.mxu0 %v204
    %241 = vmatprep.subr.mxu0 0.0
    %242 = vmatpush1.msra.mxu0 %v205
    %243 = vmatprep.subr.mxu0 0.0
    %244 = vmatpush1.msra.mxu0 %v206
    %245 = vmatprep.subr.mxu0 0.0
    %246 = vmatpush1.msra.mxu0 %v207
    %247 = vmatprep.subr.mxu0 0.0
    %248 = vmatpush1.msra.mxu0 0.0
    %249 = vmatprep.subr.mxu0 0.0
    %250 = vmatpush1.msra.mxu0 0.0
    %251 = vmatprep.subr.mxu0 0.0
    %252 = vmatpush1.msra.mxu0 0.0
    %253 = vmatprep.subr.mxu0 0.0
    %254 = vmatpush1.msra.mxu0 0.0
    %255 = vmatprep.subr.mxu0 0.0
    %256 = vmatpush1.msra.mxu0 0.0
    %257 = vmatprep.subr.mxu0 0.0
    %258 = vmatpush1.msra.mxu0 0.0
    %259 = vmatprep.subr.mxu0 0.0
    %260 = vmatpush1.msra.mxu0 0.0
    %261 = vmatprep.subr.mxu0 0.0
    %262 = vmatpush1.msra.mxu0 0.0
    %263 = vmatprep.subr.mxu0 0.0
    %264 = vmatpush1.msra.mxu0 0.0
    %265 = vmatprep.subr.mxu0 0.0
    %266 = vmatpush1.msra.mxu0 0.0
    %267 = vmatprep.subr.mxu0 0.0
    %268 = vmatpush1.msra.mxu0 0.0
    %269 = vmatprep.subr.mxu0 0.0
    %270 = vmatpush1.msra.mxu0 0.0
    %271 = vmatprep.subr.mxu0 0.0
    %272 = vmatpush1.msra.mxu0 0.0
    %273 = vmatprep.subr.mxu0 0.0
    %274 = vmatpush1.msra.mxu0 0.0
    %275 = vmatprep.subr.mxu0 0.0
    %276 = vmatpush1.msra.mxu0 0.0
    %277 = vmatprep.subr.mxu0 0.0
    %278 = vmatpush1.msra.mxu0 0.0
    %279 = vmatprep.mubr.f32.mxu0 0.0
    %280 = vmatmul.mubr.f32.gmra.mrb[0].mxu0 %v190
    %v281 = vpop.f32.mrb[0].mxu0
    %v282 = vadd.f32 %v213, %v281
    %v283 = vpop.f32.mrb[0].mxu0
    %284 = vmatprep.mubr.f32.mxu0 0.0
    %285 = vmatmul.mubr.f32.gmra.mrb[0].mxu0 %v191
    %v286 = vpop.f32.mrb[0].mxu0
    %v287 = vadd.f32 %v213, %v286
    %v288 = vpop.f32.mrb[0].mxu0
    %289 = vdwg.mxu0
    %v290 = vtanh.pop %v282
    %v291 = vtanh.pop %v287
    %v292 = vld [vmem:[#allocation7] sm:$0xff]
    %v293 = vld [vmem:[#allocation7 + $0x8] sm:$0xff]
    %v294 = vld [vmem:[#allocation7 + $0x10] sm:$0xff]
    %v295 = vld [vmem:[#allocation7 + $0x18] sm:$0xff]
    %v296 = vld [vmem:[#allocation7 + $0x20] sm:$0xff]
    %v297 = vld [vmem:[#allocation7 + $0x28] sm:$0xff]
    %v298 = vld [vmem:[#allocation7 + $0x30] sm:$0xff]
    %v299 = vld [vmem:[#allocation7 + $0x38] sm:$0xff]
    %v300 = vld [vmem:[#allocation7 + $0x40] sm:$0xff]
    %v301 = vld [vmem:[#allocation7 + $0x48] sm:$0xff]
    %v302 = vld [vmem:[#allocation7 + $0x50] sm:$0xff]
    %v303 = vld [vmem:[#allocation7 + $0x58] sm:$0xff]
    %v304 = vld [vmem:[#allocation7 + $0x60] sm:$0xff]
    %v305 = vld [vmem:[#allocation7 + $0x68] sm:$0xff]
    %v306 = vld [vmem:[#allocation7 + $0x70] sm:$0xff]
    %v307 = vld [vmem:[#allocation7 + $0x78] sm:$0xff]
    %v308 = vld [vmem:[%s6] sm:$0x1]
    %v310 = vlaneseq
    %v311 = vshrl.u32 %v310, 7
    %v312 = vsub.s32 0, %v311
    %v313 = vrot.slane %v308, %v312
    %315 = vmatprep.subr.mxu0 0.0
    %316 = vmatpush1.msra.mxu0 %v292
    %317 = vmatprep.subr.mxu0 0.0
    %318 = vmatpush1.msra.mxu0 %v293
    %319 = vmatprep.subr.mxu0 0.0
    %320 = vmatpush1.msra.mxu0 %v294
    %321 = vmatprep.subr.mxu0 0.0
    %322 = vmatpush1.msra.mxu0 %v295
    %323 = vmatprep.subr.mxu0 0.0
    %324 = vmatpush1.msra.mxu0 %v296
    %325 = vmatprep.subr.mxu0 0.0
    %326 = vmatpush1.msra.mxu0 %v297
    %327 = vmatprep.subr.mxu0 0.0
    %328 = vmatpush1.msra.mxu0 %v298
    %329 = vmatprep.subr.mxu0 0.0
    %330 = vmatpush1.msra.mxu0 %v299
    %331 = vmatprep.subr.mxu0 0.0
    %332 = vmatpush1.msra.mxu0 %v300
    %333 = vmatprep.subr.mxu0 0.0
    %334 = vmatpush1.msra.mxu0 %v301
    %335 = vmatprep.subr.mxu0 0.0
    %336 = vmatpush1.msra.mxu0 %v302
    %337 = vmatprep.subr.mxu0 0.0
    %338 = vmatpush1.msra.mxu0 %v303
    %339 = vmatprep.subr.mxu0 0.0
    %340 = vmatpush1.msra.mxu0 %v304
    %341 = vmatprep.subr.mxu0 0.0
    %342 = vmatpush1.msra.mxu0 %v305
    %343 = vmatprep.subr.mxu0 0.0
    %344 = vmatpush1.msra.mxu0 %v306
    %345 = vmatprep.subr.mxu0 0.0
    %346 = vmatpush1.msra.mxu0 %v307
    %347 = vmatprep.subr.mxu0 0.0
    %348 = vmatpush1.msra.mxu0 0.0
    %349 = vmatprep.subr.mxu0 0.0
    %350 = vmatpush1.msra.mxu0 0.0
    %351 = vmatprep.subr.mxu0 0.0
    %352 = vmatpush1.msra.mxu0 0.0
    %353 = vmatprep.subr.mxu0 0.0
    %354 = vmatpush1.msra.mxu0 0.0
    %355 = vmatprep.subr.mxu0 0.0
    %356 = vmatpush1.msra.mxu0 0.0
    %357 = vmatprep.subr.mxu0 0.0
    %358 = vmatpush1.msra.mxu0 0.0
    %359 = vmatprep.subr.mxu0 0.0
    %360 = vmatpush1.msra.mxu0 0.0
    %361 = vmatprep.subr.mxu0 0.0
    %362 = vmatpush1.msra.mxu0 0.0
    %363 = vmatprep.subr.mxu0 0.0
    %364 = vmatpush1.msra.mxu0 0.0
    %365 = vmatprep.subr.mxu0 0.0
    %366 = vmatpush1.msra.mxu0 0.0
    %367 = vmatprep.subr.mxu0 0.0
    %368 = vmatpush1.msra.mxu0 0.0
    %369 = vmatprep.subr.mxu0 0.0
    %370 = vmatpush1.msra.mxu0 0.0
    %371 = vmatprep.subr.mxu0 0.0
    %372 = vmatpush1.msra.mxu0 0.0
    %373 = vmatprep.subr.mxu0 0.0
    %374 = vmatpush1.msra.mxu0 0.0
    %375 = vmatprep.subr.mxu0 0.0
    %376 = vmatpush1.msra.mxu0 0.0
    %377 = vmatprep.subr.mxu0 0.0
    %378 = vmatpush1.msra.mxu0 0.0
    %379 = vmatprep.mubr.f32.mxu0 0.0
    %380 = vmatmul.mubr.f32.gmra.mrb[0].mxu0 %v290
    %v381 = vpop.f32.mrb[0].mxu0
    %v382 = vadd.f32 %v313, %v381
    %v383 = vpop.f32.mrb[0].mxu0
    %384 = vmatprep.mubr.f32.mxu0 0.0
    %385 = vmatmul.mubr.f32.gmra.mrb[0].mxu0 %v291
    %v386 = vpop.f32.mrb[0].mxu0
    %v387 = vadd.f32 %v313, %v386
    %v388 = vpop.f32.mrb[0].mxu0
    %389 = vdwg.mxu0
    %v390 = vmul.f32 %v382, 0.2
    %v391 = vmul.f32 %v387, 0.2
    %v392 = vmax.f32 %v382, %v390
    %v393 = vmax.f32 %v387, %v391
    %v394 = vld [vmem:[#allocation8] sm:$0xff]
    %v395 = vld [vmem:[#allocation8 + $0x8] sm:$0xff]
    %v396 = vld [vmem:[#allocation8 + $0x10] sm:$0xff]
    %v397 = vld [vmem:[#allocation8 + $0x18] sm:$0xff]
    %v398 = vld [vmem:[#allocation8 + $0x20] sm:$0xff]
    %v399 = vld [vmem:[#allocation8 + $0x28] sm:$0xff]
    %v400 = vld [vmem:[#allocation8 + $0x30] sm:$0xff]
    %v401 = vld [vmem:[#allocation8 + $0x38] sm:$0xff]
    %v402 = vld [vmem:[#allocation8 + $0x40] sm:$0xff]
    %v403 = vld [vmem:[#allocation8 + $0x48] sm:$0xff]
    %v404 = vld [vmem:[#allocation8 + $0x50] sm:$0xff]
    %v405 = vld [vmem:[#allocation8 + $0x58] sm:$0xff]
    %v406 = vld [vmem:[#allocation8 + $0x60] sm:$0xff]
    %v407 = vld [vmem:[#allocation8 + $0x68] sm:$0xff]
    %v408 = vld [vmem:[#allocation8 + $0x70] sm:$0xff]
    %v409 = vld [vmem:[#allocation8 + $0x78] sm:$0xff]
    %v410 = vld [vmem:[%s8] sm:$0x1]
    %v412 = vlaneseq
    %v413 = vshrl.u32 %v412, 7
    %v414 = vsub.s32 0, %v413
    %v415 = vrot.slane %v410, %v414
    %417 = vmatprep.subr.mxu0 0.0
    %418 = vmatpush1.msra.mxu0 %v394
    %419 = vmatprep.subr.mxu0 0.0
    %420 = vmatpush1.msra.mxu0 %v395
    %421 = vmatprep.subr.mxu0 0.0
    %422 = vmatpush1.msra.mxu0 %v396
    %423 = vmatprep.subr.mxu0 0.0
    %424 = vmatpush1.msra.mxu0 %v397
    %425 = vmatprep.subr.mxu0 0.0
    %426 = vmatpush1.msra.mxu0 %v398
    %427 = vmatprep.subr.mxu0 0.0
    %428 = vmatpush1.msra.mxu0 %v399
    %429 = vmatprep.subr.mxu0 0.0
    %430 = vmatpush1.msra.mxu0 %v400
    %431 = vmatprep.subr.mxu0 0.0
    %432 = vmatpush1.msra.mxu0 %v401
    %433 = vmatprep.subr.mxu0 0.0
    %434 = vmatpush1.msra.mxu0 %v402
    %435 = vmatprep.subr.mxu0 0.0
    %436 = vmatpush1.msra.mxu0 %v403
    %437 = vmatprep.subr.mxu0 0.0
    %438 = vmatpush1.msra.mxu0 %v404
    %439 = vmatprep.subr.mxu0 0.0
    %440 = vmatpush1.msra.mxu0 %v405
    %441 = vmatprep.subr.mxu0 0.0
    %442 = vmatpush1.msra.mxu0 %v406
    %443 = vmatprep.subr.mxu0 0.0
    %444 = vmatpush1.msra.mxu0 %v407
    %445 = vmatprep.subr.mxu0 0.0
    %446 = vmatpush1.msra.mxu0 %v408
    %447 = vmatprep.subr.mxu0 0.0
    %448 = vmatpush1.msra.mxu0 %v409
    %449 = vmatprep.subr.mxu0 0.0
    %450 = vmatpush1.msra.mxu0 0.0
    %451 = vmatprep.subr.mxu0 0.0
    %452 = vmatpush1.msra.mxu0 0.0
    %453 = vmatprep.subr.mxu0 0.0
    %454 = vmatpush1.msra.mxu0 0.0
    %455 = vmatprep.subr.mxu0 0.0
    %456 = vmatpush1.msra.mxu0 0.0
    %457 = vmatprep.subr.mxu0 0.0
    %458 = vmatpush1.msra.mxu0 0.0
    %459 = vmatprep.subr.mxu0 0.0
    %460 = vmatpush1.msra.mxu0 0.0
    %461 = vmatprep.subr.mxu0 0.0
    %462 = vmatpush1.msra.mxu0 0.0
    %463 = vmatprep.subr.mxu0 0.0
    %464 = vmatpush1.msra.mxu0 0.0
    %465 = vmatprep.subr.mxu0 0.0
    %466 = vmatpush1.msra.mxu0 0.0
    %467 = vmatprep.subr.mxu0 0.0
    %468 = vmatpush1.msra.mxu0 0.0
    %469 = vmatprep.subr.mxu0 0.0
    %470 = vmatpush1.msra.mxu0 0.0
    %471 = vmatprep.subr.mxu0 0.0
    %472 = vmatpush1.msra.mxu0 0.0
    %473 = vmatprep.subr.mxu0 0.0
    %474 = vmatpush1.msra.mxu0 0.0
    %475 = vmatprep.subr.mxu0 0.0
    %476 = vmatpush1.msra.mxu0 0.0
    %477 = vmatprep.subr.mxu0 0.0
    %478 = vmatpush1.msra.mxu0 0.0
    %479 = vmatprep.subr.mxu0 0.0
    %480 = vmatpush1.msra.mxu0 0.0
    %481 = vmatprep.mubr.f32.mxu0 0.0
    %482 = vmatmul.mubr.f32.gmra.mrb[0].mxu0 %v392
    %v483 = vpop.f32.mrb[0].mxu0
    %v484 = vadd.f32 %v415, %v483
    %v485 = vpop.f32.mrb[0].mxu0
    %486 = vmatprep.mubr.f32.mxu0 0.0
    %487 = vmatmul.mubr.f32.gmra.mrb[0].mxu0 %v393
    %v488 = vpop.f32.mrb[0].mxu0
    %v489 = vadd.f32 %v415, %v488
    %v490 = vpop.f32.mrb[0].mxu0
    %491 = vdwg.mxu0
    %v492 = vtanh.pop %v484
    %v493 = vtanh.pop %v489
    %494 = vst [vmem:[#allocation10] sm:$0xff] %v492
    %495 = vst [vmem:[#allocation10 + $0x8] sm:$0xff] %v493
    // Predicated region
    $region54: #{_vanilla_ae_pallas.1} parent=1 // pred_check
      _
    $region55: #{_vanilla_ae_pallas.1} parent=1 // pred_check_branch
      %497 = sbr.rel (0) target = $region57
    $region56: #{_vanilla_ae_pallas.1} parent=1 // pred_region
      %s499 = ssub.s32 256, 256
      %500 = vsyncadd [#allocation4], %s499
      %s501 = sshll.u32 [#allocation10], 4
      %s502 = int_to_ptr.vmem [resolvable:$true] %s501
      %507 = dma.vmem_to_hbm [thread:$0]  %s502, 256, %s9, [#allocation4], 128, 128, 8
    $region57: #{_vanilla_ae_pallas.1} parent=1 // pred_fallthru
      _
    // Predicated region
    $region58: #{_vanilla_ae_pallas.1} parent=1 // pred_check
      _
    $region59: #{_vanilla_ae_pallas.1} parent=1 // pred_check_branch
      %509 = sbr.rel (0) target = $region61
    $region60: #{_vanilla_ae_pallas.1} parent=1 // pred_region
      %510 = dma.done [#allocation4], 256
    $region61: #{_vanilla_ae_pallas.1} parent=1 // pred_fallthru
      _
    %511 = vsyncpa [#allocation3], 1
    %512 = vsyncpa [#allocation6], 1
    %513 = vsyncpa [#allocation9], 1
    %514 = vsyncpa [#allocation4], 1

// kernel: _vanilla_ae_pallas.1
$region0: #{_vanilla_ae_pallas.1}
  #allocation0 [shape = 'u32[]', space=smem, size = 0x4, offset = 0x4, fixed_abs, tag = 'smem constant byte address 0x4 - core index']
  #allocation1 [shape = 'u32[144,128]{1,0:T(1,128)}', space=vmem, size = 0x12000, scoped, tag = 'internal scratch']
  %s0 = inlined_call_operand.vmem [shape: f32[16,128], index: 0, kind: input, shape index: {}]
  %s1 = inlined_call_operand.hbm [shape: f32[128,128], index: 1, kind: input, shape index: {}]
  %s2 = inlined_call_operand.vmem [shape: f32[1,128], index: 2, kind: input, shape index: {}]
  %s3 = inlined_call_operand.hbm [shape: f32[128,128], index: 3, kind: input, shape index: {}]
  %s4 = inlined_call_operand.vmem [shape: f32[1,128], index: 4, kind: input, shape index: {}]
  %s5 = inlined_call_operand.hbm [shape: f32[128,128], index: 5, kind: input, shape index: {}]
  %s6 = inlined_call_operand.vmem [shape: f32[1,128], index: 6, kind: input, shape index: {}]
  %s7 = inlined_call_operand.hbm [shape: f32[128,128], index: 7, kind: input, shape index: {}]
  %s8 = inlined_call_operand.vmem [shape: f32[1,128], index: 8, kind: input, shape index: {}]
  %s9 = inlined_call_operand.hbm [shape: f32[16,128], index: 9, kind: output, shape index: {}]
  %s10 = sld [smem:[#allocation0]]
  $region62: #{_vanilla_ae_pallas.1} parent=0
    _
  %s12 = ssub.s32 1, %s10
  %s13 = scalar_select 0, %s12, %s10
  $region1: #{_vanilla_ae_pallas.1} parent=0
    #allocation2 [shape = 'u8[65536]{0}', space=vmem, size = 0x10000, scoped, tag = 'input window, operand 1, single buffered']
    #allocation3 [shape = 's32[1]{0}', space=sflag, size = 0x4, scoped, tag = 'scoped memory for _vanilla_ae_pallas.1']
    #allocation4 [shape = 's32[1]{0}', space=sflag, size = 0x4, scoped, tag = 'scoped memory for _vanilla_ae_pallas.1']
    #allocation5 [shape = 'u8[65536]{0}', space=vmem, size = 0x10000, scoped, tag = 'input window, operand 3, single buffered']
    #allocation6 [shape = 's32[1]{0}', space=sflag, size = 0x4, scoped, tag = 'scoped memory for _vanilla_ae_pallas.1']
    #allocation7 [shape = 'u8[65536]{0}', space=vmem, size = 0x10000, scoped, tag = 'input window, operand 5, single buffered']
    #allocation8 [shape = 'u8[65536]{0}', space=vmem, size = 0x10000, scoped, tag = 'input window, operand 7, single buffered']
    #allocation9 [shape = 's32[1]{0}', space=sflag, size = 0x4, scoped, tag = 'scoped memory for _vanilla_ae_pallas.1']
    #allocation10 [shape = 'u8[8192]{0}', space=vmem, size = 0x2000, scoped, tag = 'output window, operand 0, single buffered']
    %14 = vsyncpa [#allocation3], 0
    %15 = vsyncpa [#allocation6], 0
    %16 = vsyncpa [#allocation9], 0
    %17 = vsyncpa [#allocation4], 0
    // Predicated region
    $region2: #{_vanilla_ae_pallas.1} parent=1 // pred_check
      _
    $region3: #{_vanilla_ae_pallas.1} parent=1 // pred_check_branch
      %19 = sbr.rel (0) target = $region5
    $region4: #{_vanilla_ae_pallas.1} parent=1 // pred_region
      _
    $region5: #{_vanilla_ae_pallas.1} parent=1 // pred_fallthru
      _
    // Predicated region
    $region6: #{_vanilla_ae_pallas.1} parent=1 // pred_check
      _
    $region7: #{_vanilla_ae_pallas.1} parent=1 // pred_check_branch
      %21 = sbr.rel (0) target = $region9
    $region8: #{_vanilla_ae_pallas.1} parent=1 // pred_region
      %s23 = ssub.s32 2048, 2048
      %24 = vsyncadd [#allocation3], %s23
      %s25 = sshll.u32 [#allocation2], 4
      %s26 = int_to_ptr.vmem [resolvable:$true] %s25
      %31 = dma.hbm_to_vmem [thread:$0]  %s1, 2048, %s26, [#allocation3], 128, 128, 8
    $region9: #{_vanilla_ae_pallas.1} parent=1 // pred_fallthru
      _
    // Predicated region
    $region10: #{_vanilla_ae_pallas.1} parent=1 // pred_check
      _
    $region11: #{_vanilla_ae_pallas.1} parent=1 // pred_check_branch
      %33 = sbr.rel (0) target = $region13
    $region12: #{_vanilla_ae_pallas.1} parent=1 // pred_region
      _
    $region13: #{_vanilla_ae_pallas.1} parent=1 // pred_fallthru
      _
    // Predicated region
    $region14: #{_vanilla_ae_pallas.1} parent=1 // pred_check
      _
    $region15: #{_vanilla_ae_pallas.1} parent=1 // pred_check_branch
      %35 = sbr.rel (0) target = $region17
    $region16: #{_vanilla_ae_pallas.1} parent=1 // pred_region
      %s37 = ssub.s32 2048, 2048
      %38 = vsyncadd [#allocation6], %s37
      %s39 = sshll.u32 [#allocation5], 4
      %s40 = int_to_ptr.vmem [resolvable:$true] %s39
      %45 = dma.hbm_to_vmem [thread:$0]  %s3, 2048, %s40, [#allocation6], 128, 128, 8
    $region17: #{_vanilla_ae_pallas.1} parent=1 // pred_fallthru
      _
    // Predicated region
    $region18: #{_vanilla_ae_pallas.1} parent=1 // pred_check
      _
    $region19: #{_vanilla_ae_pallas.1} parent=1 // pred_check_branch
      %47 = sbr.rel (0) target = $region21
    $region20: #{_vanilla_ae_pallas.1} parent=1 // pred_region
      _
    $region21: #{_vanilla_ae_pallas.1} parent=1 // pred_fallthru
      _
    // Predicated region
    $region22: #{_vanilla_ae_pallas.1} parent=1 // pred_check
      _
    $region23: #{_vanilla_ae_pallas.1} parent=1 // pred_check_branch
      %49 = sbr.rel (0) target = $region25
    $region24: #{_vanilla_ae_pallas.1} parent=1 // pred_region
      %s51 = ssub.s32 2048, 2048
      %52 = vsyncadd [#allocation6], %s51
      %s53 = sshll.u32 [#allocation7], 4
      %s54 = int_to_ptr.vmem [resolvable:$true] %s53
      %59 = dma.hbm_to_vmem [thread:$0]  %s5, 2048, %s54, [#allocation6], 128, 128, 8
    $region25: #{_vanilla_ae_pallas.1} parent=1 // pred_fallthru
      _
    // Predicated region
    $region26: #{_vanilla_ae_pallas.1} parent=1 // pred_check
      _
    $region27: #{_vanilla_ae_pallas.1} parent=1 // pred_check_branch
      %61 = sbr.rel (0) target = $region29
    $region28: #{_vanilla_ae_pallas.1} parent=1 // pred_region
      _
    $region29: #{_vanilla_ae_pallas.1} parent=1 // pred_fallthru
      _
    // Predicated region
    $region30: #{_vanilla_ae_pallas.1} parent=1 // pred_check
      _
    $region31: #{_vanilla_ae_pallas.1} parent=1 // pred_check_branch
      %63 = sbr.rel (0) target = $region33
    $region32: #{_vanilla_ae_pallas.1} parent=1 // pred_region
      %s65 = ssub.s32 2048, 2048
      %66 = vsyncadd [#allocation9], %s65
      %s67 = sshll.u32 [#allocation8], 4
      %s68 = int_to_ptr.vmem [resolvable:$true] %s67
      %73 = dma.hbm_to_vmem [thread:$0]  %s7, 2048, %s68, [#allocation9], 128, 128, 8
    $region33: #{_vanilla_ae_pallas.1} parent=1 // pred_fallthru
      _
    // Predicated region
    $region34: #{_vanilla_ae_pallas.1} parent=1 // pred_check
      _
    $region35: #{_vanilla_ae_pallas.1} parent=1 // pred_check_branch
      %75 = sbr.rel (0) target = $region37
    $region36: #{_vanilla_ae_pallas.1} parent=1 // pred_region
      _
    $region37: #{_vanilla_ae_pallas.1} parent=1 // pred_fallthru
      _
    // Predicated region
    $region38: #{_vanilla_ae_pallas.1} parent=1 // pred_check
      _
    $region39: #{_vanilla_ae_pallas.1} parent=1 // pred_check_branch
      %77 = sbr.rel (0) target = $region41
    $region40: #{_vanilla_ae_pallas.1} parent=1 // pred_region
      %78 = dma.done [#allocation3], 2048
    $region41: #{_vanilla_ae_pallas.1} parent=1 // pred_fallthru
      _
    // Predicated region
    $region42: #{_vanilla_ae_pallas.1} parent=1 // pred_check
      _
    $region43: #{_vanilla_ae_pallas.1} parent=1 // pred_check_branch
      %80 = sbr.rel (0) target = $region45
    $region44: #{_vanilla_ae_pallas.1} parent=1 // pred_region
      %81 = dma.done [#allocation6], 2048
    $region45: #{_vanilla_ae_pallas.1} parent=1 // pred_fallthru
      _
    // Predicated region
    $region46: #{_vanilla_ae_pallas.1} parent=1 // pred_check
      _
    $region47: #{_vanilla_ae_pallas.1} parent=1 // pred_check_branch
      %83 = sbr.rel (0) target = $region49
    $region48: #{_vanilla_ae_pallas.1} parent=1 // pred_region
      %84 = dma.done [#allocation6], 2048
    $region49: #{_vanilla_ae_pallas.1} parent=1 // pred_fallthru
      _
    // Predicated region
    $region50: #{_vanilla_ae_pallas.1} parent=1 // pred_check
      _
    $region51: #{_vanilla_ae_pallas.1} parent=1 // pred_check_branch
      %86 = sbr.rel (0) target = $region53
    $region52: #{_vanilla_ae_pallas.1} parent=1 // pred_region
      %87 = dma.done [#allocation9], 2048
    $region53: #{_vanilla_ae_pallas.1} parent=1 // pred_fallthru
      _
    %v88 = vld [vmem:[%s0] sm:$0xff]
    %v89 = vld [vmem:[%s0 + $0x8] sm:$0xff]
    %v90 = vld [vmem:[#allocation2] sm:$0xff]
    %v91 = vld [vmem:[#allocation2 + $0x8] sm:$0xff]
    %v92 = vld [vmem:[#allocation2 + $0x10] sm:$0xff]
    %v93 = vld [vmem:[#allocation2 + $0x18] sm:$0xff]
    %v94 = vld [vmem:[#allocation2 + $0x20] sm:$0xff]
    %v95 = vld [vmem:[#allocation2 + $0x28] sm:$0xff]
    %v96 = vld [vmem:[#allocation2 + $0x30] sm:$0xff]
    %v97 = vld [vmem:[#allocation2 + $0x38] sm:$0xff]
    %v98 = vld [vmem:[#allocation2 + $0x40] sm:$0xff]
    %v99 = vld [vmem:[#allocation2 + $0x48] sm:$0xff]
    %v100 = vld [vmem:[#allocation2 + $0x50] sm:$0xff]
    %v101 = vld [vmem:[#allocation2 + $0x58] sm:$0xff]
    %v102 = vld [vmem:[#allocation2 + $0x60] sm:$0xff]
    %v103 = vld [vmem:[#allocation2 + $0x68] sm:$0xff]
    %v104 = vld [vmem:[#allocation2 + $0x70] sm:$0xff]
    %v105 = vld [vmem:[#allocation2 + $0x78] sm:$0xff]
    %v106 = vld [vmem:[%s2] sm:$0x1]
    %v108 = vlaneseq
    %v109 = vshrl.u32 %v108, 7
    %v110 = vsub.s32 0, %v109
    %v111 = vrot.slane %v106, %v110
    %113 = vmatprep.subr.mxu0 0.0
    %114 = vmatpush1.msra.mxu0 %v90
    %115 = vmatprep.subr.mxu0 0.0
    %116 = vmatpush1.msra.mxu0 %v91
    %117 = vmatprep.subr.mxu0 0.0
    %118 = vmatpush1.msra.mxu0 %v92
    %119 = vmatprep.subr.mxu0 0.0
    %120 = vmatpush1.msra.mxu0 %v93
    %121 = vmatprep.subr.mxu0 0.0
    %122 = vmatpush1.msra.mxu0 %v94
    %123 = vmatprep.subr.mxu0 0.0
    %124 = vmatpush1.msra.mxu0 %v95
    %125 = vmatprep.subr.mxu0 0.0
    %126 = vmatpush1.msra.mxu0 %v96
    %127 = vmatprep.subr.mxu0 0.0
    %128 = vmatpush1.msra.mxu0 %v97
    %129 = vmatprep.subr.mxu0 0.0
    %130 = vmatpush1.msra.mxu0 %v98
    %131 = vmatprep.subr.mxu0 0.0
    %132 = vmatpush1.msra.mxu0 %v99
    %133 = vmatprep.subr.mxu0 0.0
    %134 = vmatpush1.msra.mxu0 %v100
    %135 = vmatprep.subr.mxu0 0.0
    %136 = vmatpush1.msra.mxu0 %v101
    %137 = vmatprep.subr.mxu0 0.0
    %138 = vmatpush1.msra.mxu0 %v102
    %139 = vmatprep.subr.mxu0 0.0
    %140 = vmatpush1.msra.mxu0 %v103
    %141 = vmatprep.subr.mxu0 0.0
    %142 = vmatpush1.msra.mxu0 %v104
    %143 = vmatprep.subr.mxu0 0.0
    %144 = vmatpush1.msra.mxu0 %v105
    %145 = vmatprep.subr.mxu0 0.0
    %146 = vmatpush1.msra.mxu0 0.0
    %147 = vmatprep.subr.mxu0 0.0
    %148 = vmatpush1.msra.mxu0 0.0
    %149 = vmatprep.subr.mxu0 0.0
    %150 = vmatpush1.msra.mxu0 0.0
    %151 = vmatprep.subr.mxu0 0.0
    %152 = vmatpush1.msra.mxu0 0.0
    %153 = vmatprep.subr.mxu0 0.0
    %154 = vmatpush1.msra.mxu0 0.0
    %155 = vmatprep.subr.mxu0 0.0
    %156 = vmatpush1.msra.mxu0 0.0
    %157 = vmatprep.subr.mxu0 0.0
    %158 = vmatpush1.msra.mxu0 0.0
    %159 = vmatprep.subr.mxu0 0.0
    %160 = vmatpush1.msra.mxu0 0.0
    %161 = vmatprep.subr.mxu0 0.0
    %162 = vmatpush1.msra.mxu0 0.0
    %163 = vmatprep.subr.mxu0 0.0
    %164 = vmatpush1.msra.mxu0 0.0
    %165 = vmatprep.subr.mxu0 0.0
    %166 = vmatpush1.msra.mxu0 0.0
    %167 = vmatprep.subr.mxu0 0.0
    %168 = vmatpush1.msra.mxu0 0.0
    %169 = vmatprep.subr.mxu0 0.0
    %170 = vmatpush1.msra.mxu0 0.0
    %171 = vmatprep.subr.mxu0 0.0
    %172 = vmatpush1.msra.mxu0 0.0
    %173 = vmatprep.subr.mxu0 0.0
    %174 = vmatpush1.msra.mxu0 0.0
    %175 = vmatprep.subr.mxu0 0.0
    %176 = vmatpush1.msra.mxu0 0.0
    %177 = vmatprep.mubr.f32.mxu0 0.0
    %178 = vmatmul.mubr.f32.gmra.mrb[0].mxu0 %v88
    %v179 = vpop.f32.mrb[0].mxu0
    %v180 = vadd.f32 %v111, %v179
    %v181 = vpop.f32.mrb[0].mxu0
    %182 = vmatprep.mubr.f32.mxu0 0.0
    %183 = vmatmul.mubr.f32.gmra.mrb[0].mxu0 %v89
    %v184 = vpop.f32.mrb[0].mxu0
    %v185 = vadd.f32 %v111, %v184
    %v186 = vpop.f32.mrb[0].mxu0
    %187 = vdwg.mxu0
    %v188 = vmul.f32 %v180, 0.2
    %v189 = vmul.f32 %v185, 0.2
    %v190 = vmax.f32 %v180, %v188
    %v191 = vmax.f32 %v185, %v189
    %v192 = vld [vmem:[#allocation5] sm:$0xff]
    %v193 = vld [vmem:[#allocation5 + $0x8] sm:$0xff]
    %v194 = vld [vmem:[#allocation5 + $0x10] sm:$0xff]
    %v195 = vld [vmem:[#allocation5 + $0x18] sm:$0xff]
    %v196 = vld [vmem:[#allocation5 + $0x20] sm:$0xff]
    %v197 = vld [vmem:[#allocation5 + $0x28] sm:$0xff]
    %v198 = vld [vmem:[#allocation5 + $0x30] sm:$0xff]
    %v199 = vld [vmem:[#allocation5 + $0x38] sm:$0xff]
    %v200 = vld [vmem:[#allocation5 + $0x40] sm:$0xff]
    %v201 = vld [vmem:[#allocation5 + $0x48] sm:$0xff]
    %v202 = vld [vmem:[#allocation5 + $0x50] sm:$0xff]
    %v203 = vld [vmem:[#allocation5 + $0x58] sm:$0xff]
    %v204 = vld [vmem:[#allocation5 + $0x60] sm:$0xff]
    %v205 = vld [vmem:[#allocation5 + $0x68] sm:$0xff]
    %v206 = vld [vmem:[#allocation5 + $0x70] sm:$0xff]
    %v207 = vld [vmem:[#allocation5 + $0x78] sm:$0xff]
    %v208 = vld [vmem:[%s4] sm:$0x1]
    %v210 = vlaneseq
    %v211 = vshrl.u32 %v210, 7
    %v212 = vsub.s32 0, %v211
    %v213 = vrot.slane %v208, %v212
    %215 = vmatprep.subr.mxu0 0.0
    %216 = vmatpush1.msra.mxu0 %v192
    %217 = vmatprep.subr.mxu0 0.0
    %218 = vmatpush1.msra.mxu0 %v193
    %219 = vmatprep.subr.mxu0 0.0
    %220 = vmatpush1.msra.mxu0 %v194
    %221 = vmatprep.subr.mxu0 0.0
    %222 = vmatpush1.msra.mxu0 %v195
    %223 = vmatprep.subr.mxu0 0.0
    %224 = vmatpush1.msra.mxu0 %v196
    %225 = vmatprep.subr.mxu0 0.0
    %226 = vmatpush1.msra.mxu0 %v197
    %227 = vmatprep.subr.mxu0 0.0
    %228 = vmatpush1.msra.mxu0 %v198
    %229 = vmatprep.subr.mxu0 0.0
    %230 = vmatpush1.msra.mxu0 %v199
    %231 = vmatprep.subr.mxu0 0.0
    %232 = vmatpush1.msra.mxu0 %v200
    %233 = vmatprep.subr.mxu0 0.0
    %234 = vmatpush1.msra.mxu0 %v201
    %235 = vmatprep.subr.mxu0 0.0
    %236 = vmatpush1.msra.mxu0 %v202
    %237 = vmatprep.subr.mxu0 0.0
    %238 = vmatpush1.msra.mxu0 %v203
    %239 = vmatprep.subr.mxu0 0.0
    %240 = vmatpush1.msra.mxu0 %v204
    %241 = vmatprep.subr.mxu0 0.0
    %242 = vmatpush1.msra.mxu0 %v205
    %243 = vmatprep.subr.mxu0 0.0
    %244 = vmatpush1.msra.mxu0 %v206
    %245 = vmatprep.subr.mxu0 0.0
    %246 = vmatpush1.msra.mxu0 %v207
    %247 = vmatprep.subr.mxu0 0.0
    %248 = vmatpush1.msra.mxu0 0.0
    %249 = vmatprep.subr.mxu0 0.0
    %250 = vmatpush1.msra.mxu0 0.0
    %251 = vmatprep.subr.mxu0 0.0
    %252 = vmatpush1.msra.mxu0 0.0
    %253 = vmatprep.subr.mxu0 0.0
    %254 = vmatpush1.msra.mxu0 0.0
    %255 = vmatprep.subr.mxu0 0.0
    %256 = vmatpush1.msra.mxu0 0.0
    %257 = vmatprep.subr.mxu0 0.0
    %258 = vmatpush1.msra.mxu0 0.0
    %259 = vmatprep.subr.mxu0 0.0
    %260 = vmatpush1.msra.mxu0 0.0
    %261 = vmatprep.subr.mxu0 0.0
    %262 = vmatpush1.msra.mxu0 0.0
    %263 = vmatprep.subr.mxu0 0.0
    %264 = vmatpush1.msra.mxu0 0.0
    %265 = vmatprep.subr.mxu0 0.0
    %266 = vmatpush1.msra.mxu0 0.0
    %267 = vmatprep.subr.mxu0 0.0
    %268 = vmatpush1.msra.mxu0 0.0
    %269 = vmatprep.subr.mxu0 0.0
    %270 = vmatpush1.msra.mxu0 0.0
    %271 = vmatprep.subr.mxu0 0.0
    %272 = vmatpush1.msra.mxu0 0.0
    %273 = vmatprep.subr.mxu0 0.0
    %274 = vmatpush1.msra.mxu0 0.0
    %275 = vmatprep.subr.mxu0 0.0
    %276 = vmatpush1.msra.mxu0 0.0
    %277 = vmatprep.subr.mxu0 0.0
    %278 = vmatpush1.msra.mxu0 0.0
    %279 = vmatprep.mubr.f32.mxu0 0.0
    %280 = vmatmul.mubr.f32.gmra.mrb[0].mxu0 %v190
    %v281 = vpop.f32.mrb[0].mxu0
    %v282 = vadd.f32 %v213, %v281
    %v283 = vpop.f32.mrb[0].mxu0
    %284 = vmatprep.mubr.f32.mxu0 0.0
    %285 = vmatmul.mubr.f32.gmra.mrb[0].mxu0 %v191
    %v286 = vpop.f32.mrb[0].mxu0
    %v287 = vadd.f32 %v213, %v286
    %v288 = vpop.f32.mrb[0].mxu0
    %289 = vdwg.mxu0
    %v290 = vtanh.pop %v282
    %v291 = vtanh.pop %v287
    %v292 = vld [vmem:[#allocation7] sm:$0xff]
    %v293 = vld [vmem:[#allocation7 + $0x8] sm:$0xff]
    %v294 = vld [vmem:[#allocation7 + $0x10] sm:$0xff]
    %v295 = vld [vmem:[#allocation7 + $0x18] sm:$0xff]
    %v296 = vld [vmem:[#allocation7 + $0x20] sm:$0xff]
    %v297 = vld [vmem:[#allocation7 + $0x28] sm:$0xff]
    %v298 = vld [vmem:[#allocation7 + $0x30] sm:$0xff]
    %v299 = vld [vmem:[#allocation7 + $0x38] sm:$0xff]
    %v300 = vld [vmem:[#allocation7 + $0x40] sm:$0xff]
    %v301 = vld [vmem:[#allocation7 + $0x48] sm:$0xff]
    %v302 = vld [vmem:[#allocation7 + $0x50] sm:$0xff]
    %v303 = vld [vmem:[#allocation7 + $0x58] sm:$0xff]
    %v304 = vld [vmem:[#allocation7 + $0x60] sm:$0xff]
    %v305 = vld [vmem:[#allocation7 + $0x68] sm:$0xff]
    %v306 = vld [vmem:[#allocation7 + $0x70] sm:$0xff]
    %v307 = vld [vmem:[#allocation7 + $0x78] sm:$0xff]
    %v308 = vld [vmem:[%s6] sm:$0x1]
    %v310 = vlaneseq
    %v311 = vshrl.u32 %v310, 7
    %v312 = vsub.s32 0, %v311
    %v313 = vrot.slane %v308, %v312
    %315 = vmatprep.subr.mxu0 0.0
    %316 = vmatpush1.msra.mxu0 %v292
    %317 = vmatprep.subr.mxu0 0.0
    %318 = vmatpush1.msra.mxu0 %v293
    %319 = vmatprep.subr.mxu0 0.0
    %320 = vmatpush1.msra.mxu0 %v294
    %321 = vmatprep.subr.mxu0 0.0
    %322 = vmatpush1.msra.mxu0 %v295
    %323 = vmatprep.subr.mxu0 0.0
    %324 = vmatpush1.msra.mxu0 %v296
    %325 = vmatprep.subr.mxu0 0.0
    %326 = vmatpush1.msra.mxu0 %v297
    %327 = vmatprep.subr.mxu0 0.0
    %328 = vmatpush1.msra.mxu0 %v298
    %329 = vmatprep.subr.mxu0 0.0
    %330 = vmatpush1.msra.mxu0 %v299
    %331 = vmatprep.subr.mxu0 0.0
    %332 = vmatpush1.msra.mxu0 %v300
    %333 = vmatprep.subr.mxu0 0.0
    %334 = vmatpush1.msra.mxu0 %v301
    %335 = vmatprep.subr.mxu0 0.0
    %336 = vmatpush1.msra.mxu0 %v302
    %337 = vmatprep.subr.mxu0 0.0
    %338 = vmatpush1.msra.mxu0 %v303
    %339 = vmatprep.subr.mxu0 0.0
    %340 = vmatpush1.msra.mxu0 %v304
    %341 = vmatprep.subr.mxu0 0.0
    %342 = vmatpush1.msra.mxu0 %v305
    %343 = vmatprep.subr.mxu0 0.0
    %344 = vmatpush1.msra.mxu0 %v306
    %345 = vmatprep.subr.mxu0 0.0
    %346 = vmatpush1.msra.mxu0 %v307
    %347 = vmatprep.subr.mxu0 0.0
    %348 = vmatpush1.msra.mxu0 0.0
    %349 = vmatprep.subr.mxu0 0.0
    %350 = vmatpush1.msra.mxu0 0.0
    %351 = vmatprep.subr.mxu0 0.0
    %352 = vmatpush1.msra.mxu0 0.0
    %353 = vmatprep.subr.mxu0 0.0
    %354 = vmatpush1.msra.mxu0 0.0
    %355 = vmatprep.subr.mxu0 0.0
    %356 = vmatpush1.msra.mxu0 0.0
    %357 = vmatprep.subr.mxu0 0.0
    %358 = vmatpush1.msra.mxu0 0.0
    %359 = vmatprep.subr.mxu0 0.0
    %360 = vmatpush1.msra.mxu0 0.0
    %361 = vmatprep.subr.mxu0 0.0
    %362 = vmatpush1.msra.mxu0 0.0
    %363 = vmatprep.subr.mxu0 0.0
    %364 = vmatpush1.msra.mxu0 0.0
    %365 = vmatprep.subr.mxu0 0.0
    %366 = vmatpush1.msra.mxu0 0.0
    %367 = vmatprep.subr.mxu0 0.0
    %368 = vmatpush1.msra.mxu0 0.0
    %369 = vmatprep.subr.mxu0 0.0
    %370 = vmatpush1.msra.mxu0 0.0
    %371 = vmatprep.subr.mxu0 0.0
    %372 = vmatpush1.msra.mxu0 0.0
    %373 = vmatprep.subr.mxu0 0.0
    %374 = vmatpush1.msra.mxu0 0.0
    %375 = vmatprep.subr.mxu0 0.0
    %376 = vmatpush1.msra.mxu0 0.0
    %377 = vmatprep.subr.mxu0 0.0
    %378 = vmatpush1.msra.mxu0 0.0
    %379 = vmatprep.mubr.f32.mxu0 0.0
    %380 = vmatmul.mubr.f32.gmra.mrb[0].mxu0 %v290
    %v381 = vpop.f32.mrb[0].mxu0
    %v382 = vadd.f32 %v313, %v381
    %v383 = vpop.f32.mrb[0].mxu0
    %384 = vmatprep.mubr.f32.mxu0 0.0
    %385 = vmatmul.mubr.f32.gmra.mrb[0].mxu0 %v291
    %v386 = vpop.f32.mrb[0].mxu0
    %v387 = vadd.f32 %v313, %v386
    %v388 = vpop.f32.mrb[0].mxu0
    %389 = vdwg.mxu0
    %v390 = vmul.f32 %v382, 0.2
    %v391 = vmul.f32 %v387, 0.2
    %v392 = vmax.f32 %v382, %v390
    %v393 = vmax.f32 %v387, %v391
    %v394 = vld [vmem:[#allocation8] sm:$0xff]
    %v395 = vld [vmem:[#allocation8 + $0x8] sm:$0xff]
    %v396 = vld [vmem:[#allocation8 + $0x10] sm:$0xff]
    %v397 = vld [vmem:[#allocation8 + $0x18] sm:$0xff]
    %v398 = vld [vmem:[#allocation8 + $0x20] sm:$0xff]
    %v399 = vld [vmem:[#allocation8 + $0x28] sm:$0xff]
    %v400 = vld [vmem:[#allocation8 + $0x30] sm:$0xff]
    %v401 = vld [vmem:[#allocation8 + $0x38] sm:$0xff]
    %v402 = vld [vmem:[#allocation8 + $0x40] sm:$0xff]
    %v403 = vld [vmem:[#allocation8 + $0x48] sm:$0xff]
    %v404 = vld [vmem:[#allocation8 + $0x50] sm:$0xff]
    %v405 = vld [vmem:[#allocation8 + $0x58] sm:$0xff]
    %v406 = vld [vmem:[#allocation8 + $0x60] sm:$0xff]
    %v407 = vld [vmem:[#allocation8 + $0x68] sm:$0xff]
    %v408 = vld [vmem:[#allocation8 + $0x70] sm:$0xff]
    %v409 = vld [vmem:[#allocation8 + $0x78] sm:$0xff]
    %v410 = vld [vmem:[%s8] sm:$0x1]
    %v412 = vlaneseq
    %v413 = vshrl.u32 %v412, 7
    %v414 = vsub.s32 0, %v413
    %v415 = vrot.slane %v410, %v414
    %417 = vmatprep.subr.mxu0 0.0
    %418 = vmatpush1.msra.mxu0 %v394
    %419 = vmatprep.subr.mxu0 0.0
    %420 = vmatpush1.msra.mxu0 %v395
    %421 = vmatprep.subr.mxu0 0.0
    %422 = vmatpush1.msra.mxu0 %v396
    %423 = vmatprep.subr.mxu0 0.0
    %424 = vmatpush1.msra.mxu0 %v397
    %425 = vmatprep.subr.mxu0 0.0
    %426 = vmatpush1.msra.mxu0 %v398
    %427 = vmatprep.subr.mxu0 0.0
    %428 = vmatpush1.msra.mxu0 %v399
    %429 = vmatprep.subr.mxu0 0.0
    %430 = vmatpush1.msra.mxu0 %v400
    %431 = vmatprep.subr.mxu0 0.0
    %432 = vmatpush1.msra.mxu0 %v401
    %433 = vmatprep.subr.mxu0 0.0
    %434 = vmatpush1.msra.mxu0 %v402
    %435 = vmatprep.subr.mxu0 0.0
    %436 = vmatpush1.msra.mxu0 %v403
    %437 = vmatprep.subr.mxu0 0.0
    %438 = vmatpush1.msra.mxu0 %v404
    %439 = vmatprep.subr.mxu0 0.0
    %440 = vmatpush1.msra.mxu0 %v405
    %441 = vmatprep.subr.mxu0 0.0
    %442 = vmatpush1.msra.mxu0 %v406
    %443 = vmatprep.subr.mxu0 0.0
    %444 = vmatpush1.msra.mxu0 %v407
    %445 = vmatprep.subr.mxu0 0.0
    %446 = vmatpush1.msra.mxu0 %v408
    %447 = vmatprep.subr.mxu0 0.0
    %448 = vmatpush1.msra.mxu0 %v409
    %449 = vmatprep.subr.mxu0 0.0
    %450 = vmatpush1.msra.mxu0 0.0
    %451 = vmatprep.subr.mxu0 0.0
    %452 = vmatpush1.msra.mxu0 0.0
    %453 = vmatprep.subr.mxu0 0.0
    %454 = vmatpush1.msra.mxu0 0.0
    %455 = vmatprep.subr.mxu0 0.0
    %456 = vmatpush1.msra.mxu0 0.0
    %457 = vmatprep.subr.mxu0 0.0
    %458 = vmatpush1.msra.mxu0 0.0
    %459 = vmatprep.subr.mxu0 0.0
    %460 = vmatpush1.msra.mxu0 0.0
    %461 = vmatprep.subr.mxu0 0.0
    %462 = vmatpush1.msra.mxu0 0.0
    %463 = vmatprep.subr.mxu0 0.0
    %464 = vmatpush1.msra.mxu0 0.0
    %465 = vmatprep.subr.mxu0 0.0
    %466 = vmatpush1.msra.mxu0 0.0
    %467 = vmatprep.subr.mxu0 0.0
    %468 = vmatpush1.msra.mxu0 0.0
    %469 = vmatprep.subr.mxu0 0.0
    %470 = vmatpush1.msra.mxu0 0.0
    %471 = vmatprep.subr.mxu0 0.0
    %472 = vmatpush1.msra.mxu0 0.0
    %473 = vmatprep.subr.mxu0 0.0
    %474 = vmatpush1.msra.mxu0 0.0
    %475 = vmatprep.subr.mxu0 0.0
    %476 = vmatpush1.msra.mxu0 0.0
    %477 = vmatprep.subr.mxu0 0.0
    %478 = vmatpush1.msra.mxu0 0.0
    %479 = vmatprep.subr.mxu0 0.0
    %480 = vmatpush1.msra.mxu0 0.0
    %481 = vmatprep.mubr.f32.mxu0 0.0
    %482 = vmatmul.mubr.f32.gmra.mrb[0].mxu0 %v392
    %v483 = vpop.f32.mrb[0].mxu0
    %v484 = vadd.f32 %v415, %v483
    %v485 = vpop.f32.mrb[0].mxu0
    %486 = vmatprep.mubr.f32.mxu0 0.0
    %487 = vmatmul.mubr.f32.gmra.mrb[0].mxu0 %v393
    %v488 = vpop.f32.mrb[0].mxu0
    %v489 = vadd.f32 %v415, %v488
    %v490 = vpop.f32.mrb[0].mxu0
    %491 = vdwg.mxu0
    %v492 = vtanh.pop %v484
    %v493 = vtanh.pop %v489
    %494 = vst [vmem:[#allocation10] sm:$0xff] %v492
    %495 = vst [vmem:[#allocation10 + $0x8] sm:$0xff] %v493
    // Predicated region
    $region54: #{_vanilla_ae_pallas.1} parent=1 // pred_check
      _
    $region55: #{_vanilla_ae_pallas.1} parent=1 // pred_check_branch
      %497 = sbr.rel (0) target = $region57
    $region56: #{_vanilla_ae_pallas.1} parent=1 // pred_region
      %s499 = ssub.s32 256, 256
      %500 = vsyncadd [#allocation4], %s499
      %s501 = sshll.u32 [#allocation10], 4
      %s502 = int_to_ptr.vmem [resolvable:$true] %s501
      %507 = dma.vmem_to_hbm [thread:$0]  %s502, 256, %s9, [#allocation4], 128, 128, 8
    $region57: #{_vanilla_ae_pallas.1} parent=1 // pred_fallthru
      _
    // Predicated region
    $region58: #{_vanilla_ae_pallas.1} parent=1 // pred_check
      _
    $region59: #{_vanilla_ae_pallas.1} parent=1 // pred_check_branch
      %509 = sbr.rel (0) target = $region61
    $region60: #{_vanilla_ae_pallas.1} parent=1 // pred_region
      %510 = dma.done [#allocation4], 256
    $region61: #{_vanilla_ae_pallas.1} parent=1 // pred_fallthru
      _
    %511 = vsyncpa [#allocation3], 1
    %512 = vsyncpa [#allocation6], 1
    %513 = vsyncpa [#allocation9], 1
    %514 = vsyncpa [#allocation4], 1

</llo_original>
